<compile_context>
chip_gen: v6e
topology: v6e:2x2x1
jax: 0.10.0
libtpu: 0.0.40
codegen_flags: <defaults>
</compile_context>

<pallas_src>
import jax
import jax.numpy as jnp
from jax.experimental import pallas as pl
from jax.experimental.pallas import tpu as pltpu

HIDDEN = 768
MID = 512
NUM_LABELS = 9      # typical NER label-set size (helper.ModelConfig().num_labels)
OUT_PAD = 128       # lane-dense padded logits width
NUM_HEADS = 4       # static config for the BERT stub (kept out of the jitted pytree)


# ----------------------------------------------------------------------------
# Pallas kernel: fused 3-layer MLP head (the module's own compute).
# Operands are bf16; all accumulation / elementwise math is f32.
# ----------------------------------------------------------------------------
def _head_kernel(x_ref, w1_ref, b1_ref, w2_ref, b2_ref, w3_ref, b3_ref, o_ref):
    x = x_ref[...]                                                     # (tm, 768) bf16
    h1 = jnp.dot(x, w1_ref[...], preferred_element_type=jnp.float32) + b1_ref[...]
    h1 = jnp.maximum(h1, 0.0).astype(jnp.bfloat16)                     # ReLU, back to bf16
    h2 = jnp.dot(h1, w2_ref[...], preferred_element_type=jnp.float32) + b2_ref[...]
    h2 = jnp.maximum(h2, 0.0).astype(jnp.bfloat16)                     # ReLU, back to bf16
    logits = jnp.dot(h2, w3_ref[...], preferred_element_type=jnp.float32) + b3_ref[...]
    o_ref[...] = logits.astype(o_ref.dtype)                            # (tm, 128) f32


def _round_up(n, m):
    return ((n + m - 1) // m) * m


def mzk_head(x, w1, b1, w2, b2, w3, b3, *, tm=256):
    """x: (N, 768) float32 -> logits (N, num_labels) float32."""
    n, d = x.shape
    assert d == HIDDEN
    num_labels = w3.shape[1]

    # Clamp the row tile for tiny inputs (multiple of 16 for bf16 sublane
    # packing); for real workloads tm stays at 256.
    tm = min(tm, max(16, _round_up(n, 16)))

    # Pad rows up to a multiple of the tile (no divisibility requirement).
    n_pad = pl.cdiv(n, tm) * tm
    if n_pad != n:
        x = jnp.pad(x, ((0, n_pad - n), (0, 0)))

    # Pad the last GEMM to a lane-dense 128-wide output (zero columns).
    w3p = jnp.pad(w3, ((0, 0), (0, OUT_PAD - num_labels)))
    b3p = jnp.pad(b3, ((0, 0), (0, OUT_PAD - num_labels)))

    # bf16 operands for the MXU; biases stay f32 (added in f32).
    xb = x.astype(jnp.bfloat16)
    w1b = w1.astype(jnp.bfloat16)
    w2b = w2.astype(jnp.bfloat16)
    w3b = w3p.astype(jnp.bfloat16)

    grid = (n_pad // tm,)
    out = pl.pallas_call(
        _head_kernel,
        out_shape=jax.ShapeDtypeStruct((n_pad, OUT_PAD), jnp.float32),
        grid_spec=pltpu.PrefetchScalarGridSpec(
            num_scalar_prefetch=0,
            grid=grid,
            in_specs=[
                pl.BlockSpec((tm, HIDDEN), lambda i: (i, 0)),          # activations, row-tiled
                pl.BlockSpec((HIDDEN, MID), lambda i: (0, 0)),         # W1 (resident)
                pl.BlockSpec((1, MID), lambda i: (0, 0)),              # b1
                pl.BlockSpec((MID, MID), lambda i: (0, 0)),            # W2 (resident)
                pl.BlockSpec((1, MID), lambda i: (0, 0)),              # b2
                pl.BlockSpec((MID, OUT_PAD), lambda i: (0, 0)),        # W3 padded (resident)
                pl.BlockSpec((1, OUT_PAD), lambda i: (0, 0)),          # b3 padded
            ],
            out_specs=pl.BlockSpec((tm, OUT_PAD), lambda i: (i, 0)),
        ),
        compiler_params=pltpu.CompilerParams(
            dimension_semantics=("parallel",)),
    )(xb, w1b, b1, w2b, b2, w3b, b3p)

    return out[:n, :num_labels]


# ----------------------------------------------------------------------------
# Deterministic stand-in for the external BERT encoder (plain JAX glue).
# Returns bert_outputs ~ (sequence_output,) matching `bert_outputs[0]` usage.
# ----------------------------------------------------------------------------
def make_bert_stub_params(key, vocab=1000, max_pos=64, hidden=HIDDEN):
    ks = jax.random.split(key, 8)
    s = 0.02
    return dict(
        tok_emb=jax.random.normal(ks[0], (vocab, hidden), jnp.float32) * s,
        pos_emb=jax.random.normal(ks[1], (max_pos, hidden), jnp.float32) * s,
        wq=jax.random.normal(ks[2], (hidden, hidden), jnp.float32) * s,
        wk=jax.random.normal(ks[3], (hidden, hidden), jnp.float32) * s,
        wv=jax.random.normal(ks[4], (hidden, hidden), jnp.float32) * s,
        wo=jax.random.normal(ks[5], (hidden, hidden), jnp.float32) * s,
        w_ff1=jax.random.normal(ks[6], (hidden, hidden), jnp.float32) * s,
        w_ff2=jax.random.normal(ks[7], (hidden, hidden), jnp.float32) * s,
    )


def bert_stub(params, input_ids, attention_mask):
    """Tiny deterministic transformer layer; returns (sequence_output,)."""
    B, S = input_ids.shape
    H = HIDDEN
    nh = NUM_HEADS                      # static Python int (not part of the jitted pytree)
    dh = H // nh
    x = params["tok_emb"][input_ids] + params["pos_emb"][:S][None, :, :]

    def ln(v):
        mu = v.mean(-1, keepdims=True)
        var = v.var(-1, keepdims=True)
        return (v - mu) * jax.lax.rsqrt(var + 1e-12)

    x = ln(x)
    q = (x @ params["wq"]).reshape(B, S, nh, dh).transpose(0, 2, 1, 3)
    k = (x @ params["wk"]).reshape(B, S, nh, dh).transpose(0, 2, 1, 3)
    v = (x @ params["wv"]).reshape(B, S, nh, dh).transpose(0, 2, 1, 3)
    scores = jnp.einsum("bhqd,bhkd->bhqk", q, k) / jnp.sqrt(dh)
    mask = (1.0 - attention_mask[:, None, None, :].astype(jnp.float32)) * -1e9
    attn = jax.nn.softmax(scores + mask, axis=-1)
    ctx = jnp.einsum("bhqk,bhkd->bhqd", attn, v).transpose(0, 2, 1, 3).reshape(B, S, H)
    x = ln(x + ctx @ params["wo"])
    x = ln(x + jax.nn.gelu(x @ params["w_ff1"]) @ params["w_ff2"])
    return (x,)


# ----------------------------------------------------------------------------
# Full MZKBert forward (eval mode; dropout = identity).
# ----------------------------------------------------------------------------
def make_head_params(key, num_labels=NUM_LABELS):
    ks = jax.random.split(key, 6)

    def linear(kw, kb, fan_in, fan_out):
        bound = 1.0 / jnp.sqrt(fan_in)
        w = jax.random.uniform(kw, (fan_in, fan_out), jnp.float32, -bound, bound)
        b = jax.random.uniform(kb, (1, fan_out), jnp.float32, -bound, bound)
        return w, b

    w1, b1 = linear(ks[0], ks[1], HIDDEN, MID)
    w2, b2 = linear(ks[2], ks[3], MID, MID)
    w3, b3 = linear(ks[4], ks[5], MID, num_labels)
    return w1, b1, w2, b2, w3, b3


@jax.jit
def mzkbert_forward(bert_params, head_params, input_ids, attention_mask, labels):
    bert_outputs = bert_stub(bert_params, input_ids, attention_mask)
    seq_out = bert_outputs[0]                              # (B, S, 768)
    B, S, _ = seq_out.shape
    x = seq_out.reshape(B * S, HIDDEN)
    logits_flat = mzk_head(x, *head_params)                # Pallas kernel, (B*S, L)
    logits = logits_flat.reshape(B, S, -1)

    # CrossEntropyLoss semantics (mean over non-ignored tokens, ignore_index=-100).
    labels_flat = labels.reshape(-1)
    valid = (labels_flat != -100).astype(jnp.float32)
    safe_labels = jnp.where(labels_flat != -100, labels_flat, 0)
    logp = jax.nn.log_softmax(logits_flat, axis=-1)
    nll = -jnp.take_along_axis(logp, safe_labels[:, None], axis=-1)[:, 0]
    loss = jnp.sum(nll * valid) / jnp.maximum(jnp.sum(valid), 1.0)
    return loss, (logits,)


def _head_reference(x, w1, b1, w2, b2, w3, b3):
    """Pure-JAX reference with matching bf16-operand / f32-accumulate math."""
    h = jnp.dot(x.astype(jnp.bfloat16), w1.astype(jnp.bfloat16),
                preferred_element_type=jnp.float32) + b1
    h = jnp.maximum(h, 0.0).astype(jnp.bfloat16)
    h = jnp.dot(h, w2.astype(jnp.bfloat16),
                preferred_element_type=jnp.float32) + b2
    h = jnp.maximum(h, 0.0).astype(jnp.bfloat16)
    return jnp.dot(h, w3.astype(jnp.bfloat16),
                   preferred_element_type=jnp.float32) + b3


if __name__ == "__main__":
    key = jax.random.PRNGKey(0)
    k_bert, k_head, k_ids, k_lab = jax.random.split(key, 4)

    B, S = 2, 8
    bert_params = make_bert_stub_params(k_bert)
    head_params = make_head_params(k_head)

    input_ids = jax.random.randint(k_ids, (B, S), 0, 1000, dtype=jnp.int32)
    attention_mask = jnp.ones((B, S), dtype=jnp.int32)
    labels = jax.random.randint(k_lab, (B, S), 0, NUM_LABELS, dtype=jnp.int32)

    loss, (logits,) = mzkbert_forward(
        bert_params, head_params, input_ids, attention_mask, labels)
    jax.block_until_ready((loss, logits))

    # Sanity check head kernel against a pure-JAX reference.
    seq_out = bert_stub(bert_params, input_ids, attention_mask)[0]
    x = seq_out.reshape(B * S, HIDDEN)
    ref_logits = _head_reference(x, *head_params).reshape(B, S, NUM_LABELS)
    assert jnp.allclose(logits, ref_logits, atol=1e-2, rtol=1e-2), "mismatch vs reference"
    assert logits.shape == (B, S, NUM_LABELS)
    assert loss.shape == ()
    assert bool(jnp.isfinite(loss))

    print("KERNEL_OK")
</pallas_src>

<mosaic_0001>
module attributes {stable_mosaic.version = 11 : i64} {
  func.func @_head_kernel(%arg0: i32, %arg1: memref<16x768xbf16, #tpu.memory_space<vmem>>, %arg2: memref<768x512xbf16, #tpu.memory_space<vmem>>, %arg3: memref<1x512xf32, #tpu.memory_space<vmem>>, %arg4: memref<512x512xbf16, #tpu.memory_space<vmem>>, %arg5: memref<1x512xf32, #tpu.memory_space<vmem>>, %arg6: memref<512x128xbf16, #tpu.memory_space<vmem>>, %arg7: memref<1x128xf32, #tpu.memory_space<vmem>>, %arg8: memref<16x128xf32, #tpu.memory_space<vmem>>) attributes {dimension_semantics = [#tpu.dimension_semantics<parallel>], iteration_bounds = array<i64: 1>, scalar_prefetch = 0 : i64, scratch_operands = 0 : i64, tpu.core_type = #tpu.core_type<tc>, window_params = [{transform_indices = @transform_0, window_bounds = array<i64: 16, 768>}, {pipeline_mode = #tpu.pipeline_mode<synchronous>, transform_indices = @transform_1, window_bounds = array<i64: 768, 512>}, {pipeline_mode = #tpu.pipeline_mode<synchronous>, transform_indices = @transform_2, window_bounds = array<i64: 1, 512>}, {pipeline_mode = #tpu.pipeline_mode<synchronous>, transform_indices = @transform_3, window_bounds = array<i64: 512, 512>}, {pipeline_mode = #tpu.pipeline_mode<synchronous>, transform_indices = @transform_4, window_bounds = array<i64: 1, 512>}, {pipeline_mode = #tpu.pipeline_mode<synchronous>, transform_indices = @transform_5, window_bounds = array<i64: 512, 128>}, {pipeline_mode = #tpu.pipeline_mode<synchronous>, transform_indices = @transform_6, window_bounds = array<i64: 1, 128>}, {transform_indices = @transform_7, window_bounds = array<i64: 16, 128>}]} {
    %c0 = arith.constant 0 : index
    %c0_0 = arith.constant 0 : index
    %0 = vector.load %arg1[%c0, %c0_0] : memref<16x768xbf16, #tpu.memory_space<vmem>>, vector<16x768xbf16>
    %c0_1 = arith.constant 0 : index
    %c0_2 = arith.constant 0 : index
    %1 = vector.load %arg2[%c0_1, %c0_2] : memref<768x512xbf16, #tpu.memory_space<vmem>>, vector<768x512xbf16>
    %cst = arith.constant dense<0.000000e+00> : vector<16x512xf32>
    %2 = tpu.matmul %0, %1, %cst {dimension_numbers = #tpu.dot_dimension_numbers<[1], [0], [0], [1], [0, 0, 1, 1], [], []>} : vector<16x768xbf16>, vector<768x512xbf16>, vector<16x512xf32> -> vector<16x512xf32>
    %c0_3 = arith.constant 0 : index
    %c0_4 = arith.constant 0 : index
    %3 = vector.load %arg3[%c0_3, %c0_4] : memref<1x512xf32, #tpu.memory_space<vmem>>, vector<1x512xf32>
    %4 = vector.broadcast %3 : vector<1x512xf32> to vector<16x512xf32>
    %5 = arith.addf %2, %4 : vector<16x512xf32>
    %cst_5 = arith.constant 0.000000e+00 : f32
    %6 = vector.broadcast %cst_5 : f32 to vector<16x512xf32>
    %7 = arith.maximumf %5, %6 : vector<16x512xf32>
    %8 = arith.truncf %7 : vector<16x512xf32> to vector<16x512xbf16>
    %c0_6 = arith.constant 0 : index
    %c0_7 = arith.constant 0 : index
    %9 = vector.load %arg4[%c0_6, %c0_7] : memref<512x512xbf16, #tpu.memory_space<vmem>>, vector<512x512xbf16>
    %cst_8 = arith.constant dense<0.000000e+00> : vector<16x512xf32>
    %10 = tpu.matmul %8, %9, %cst_8 {dimension_numbers = #tpu.dot_dimension_numbers<[1], [0], [0], [1], [0, 0, 1, 1], [], []>} : vector<16x512xbf16>, vector<512x512xbf16>, vector<16x512xf32> -> vector<16x512xf32>
    %c0_9 = arith.constant 0 : index
    %c0_10 = arith.constant 0 : index
    %11 = vector.load %arg5[%c0_9, %c0_10] : memref<1x512xf32, #tpu.memory_space<vmem>>, vector<1x512xf32>
    %12 = vector.broadcast %11 : vector<1x512xf32> to vector<16x512xf32>
    %13 = arith.addf %10, %12 : vector<16x512xf32>
    %cst_11 = arith.constant 0.000000e+00 : f32
    %14 = vector.broadcast %cst_11 : f32 to vector<16x512xf32>
    %15 = arith.maximumf %13, %14 : vector<16x512xf32>
    %16 = arith.truncf %15 : vector<16x512xf32> to vector<16x512xbf16>
    %c0_12 = arith.constant 0 : index
    %c0_13 = arith.constant 0 : index
    %17 = vector.load %arg6[%c0_12, %c0_13] : memref<512x128xbf16, #tpu.memory_space<vmem>>, vector<512x128xbf16>
    %cst_14 = arith.constant dense<0.000000e+00> : vector<16x128xf32>
    %18 = tpu.matmul %16, %17, %cst_14 {dimension_numbers = #tpu.dot_dimension_numbers<[1], [0], [0], [1], [0, 0, 1, 1], [], []>} : vector<16x512xbf16>, vector<512x128xbf16>, vector<16x128xf32> -> vector<16x128xf32>
    %c0_15 = arith.constant 0 : index
    %c0_16 = arith.constant 0 : index
    %19 = vector.load %arg7[%c0_15, %c0_16] : memref<1x128xf32, #tpu.memory_space<vmem>>, vector<1x128xf32>
    %20 = vector.broadcast %19 : vector<1x128xf32> to vector<16x128xf32>
    %21 = arith.addf %18, %20 : vector<16x128xf32>
    %c0_17 = arith.constant 0 : index
    %c0_18 = arith.constant 0 : index
    %22 = vector.load %arg8[%c0_17, %c0_18] : memref<16x128xf32, #tpu.memory_space<vmem>>, vector<16x128xf32>
    tpu.vector_store %arg8[%c0_17, %c0_18], %21 {strides = array<i32>} : memref<16x128xf32, #tpu.memory_space<vmem>>, vector<16x128xf32>,
    return
  }
  func.func @transform_0(%arg0: i32) -> (i32, i32) {
    %c0_i32 = arith.constant 0 : i32
    %c0_i32_0 = arith.constant 0 : i32
    return %arg0, %c0_i32 : i32, i32
  }
  func.func @transform_1(%arg0: i32) -> (i32, i32) {
    %c0_i32 = arith.constant 0 : i32
    %c0_i32_0 = arith.constant 0 : i32
    %c0_i32_1 = arith.constant 0 : i32
    return %c0_i32, %c0_i32_0 : i32, i32
  }
  func.func @transform_2(%arg0: i32) -> (i32, i32) {
    %c0_i32 = arith.constant 0 : i32
    %c0_i32_0 = arith.constant 0 : i32
    %c0_i32_1 = arith.constant 0 : i32
    return %c0_i32, %c0_i32_0 : i32, i32
  }
  func.func @transform_3(%arg0: i32) -> (i32, i32) {
    %c0_i32 = arith.constant 0 : i32
    %c0_i32_0 = arith.constant 0 : i32
    %c0_i32_1 = arith.constant 0 : i32
    return %c0_i32, %c0_i32_0 : i32, i32
  }
  func.func @transform_4(%arg0: i32) -> (i32, i32) {
    %c0_i32 = arith.constant 0 : i32
    %c0_i32_0 = arith.constant 0 : i32
    %c0_i32_1 = arith.constant 0 : i32
    return %c0_i32, %c0_i32_0 : i32, i32
  }
  func.func @transform_5(%arg0: i32) -> (i32, i32) {
    %c0_i32 = arith.constant 0 : i32
    %c0_i32_0 = arith.constant 0 : i32
    %c0_i32_1 = arith.constant 0 : i32
    return %c0_i32, %c0_i32_0 : i32, i32
  }
  func.func @transform_6(%arg0: i32) -> (i32, i32) {
    %c0_i32 = arith.constant 0 : i32
    %c0_i32_0 = arith.constant 0 : i32
    %c0_i32_1 = arith.constant 0 : i32
    return %c0_i32, %c0_i32_0 : i32, i32
  }
  func.func @transform_7(%arg0: i32) -> (i32, i32) {
    %c0_i32 = arith.constant 0 : i32
    %c0_i32_0 = arith.constant 0 : i32
    return %arg0, %c0_i32 : i32, i32
  }
}

</mosaic_0001>

<llo_original>
// kernel: mzkbert_forward.1
$region0: #{mzkbert_forward.1}
  #allocation0 [shape = 'u32[]', space=smem, size = 0x4, offset = 0x4, fixed_abs, tag = 'smem constant byte address 0x4 - core index']
  #allocation1 [shape = 'u32[144,128]{1,0:T(1,128)}', space=vmem, size = 0x12000, scoped, tag = 'internal scratch']
  %s0 = inlined_call_operand.vmem [shape: bf16[16,768], index: 0, kind: input, shape index: {}]
  %s1 = inlined_call_operand.vmem [shape: bf16[768,512], index: 1, kind: input, shape index: {}]
  %s2 = inlined_call_operand.vmem [shape: f32[1,512], index: 2, kind: input, shape index: {}]
  %s3 = inlined_call_operand.vmem [shape: bf16[512,512], index: 3, kind: input, shape index: {}]
  %s4 = inlined_call_operand.vmem [shape: f32[1,512], index: 4, kind: input, shape index: {}]
  %s5 = inlined_call_operand.vmem [shape: bf16[512,128], index: 5, kind: input, shape index: {}]
  %s6 = inlined_call_operand.vmem [shape: f32[1,128], index: 6, kind: input, shape index: {}]
  %s7 = inlined_call_operand.vmem [shape: f32[16,128], index: 7, kind: output, shape index: {}]
  %s8 = sld [smem:[#allocation0]]
  $region38: #{mzkbert_forward.1} parent=0
    _
  %s10 = ssub.s32 1, %s8
  %s11 = scalar_select 0, %s10, %s8
  // Predicated region
  $region2: #{mzkbert_forward.1} parent=0 // pred_check
    _
  $region3: #{mzkbert_forward.1} parent=0 // pred_check_branch
    %13 = sbr.rel (0) target = $region5
  $region4: #{mzkbert_forward.1} parent=0 // pred_region
    _
  $region5: #{mzkbert_forward.1} parent=0 // pred_fallthru
    _
  // Predicated region
  $region6: #{mzkbert_forward.1} parent=0 // pred_check
    _
  $region7: #{mzkbert_forward.1} parent=0 // pred_check_branch
    %15 = sbr.rel (0) target = $region9
  $region8: #{mzkbert_forward.1} parent=0 // pred_region
    _
  $region9: #{mzkbert_forward.1} parent=0 // pred_fallthru
    _
  // Predicated region
  $region10: #{mzkbert_forward.1} parent=0 // pred_check
    _
  $region11: #{mzkbert_forward.1} parent=0 // pred_check_branch
    %17 = sbr.rel (0) target = $region13
  $region12: #{mzkbert_forward.1} parent=0 // pred_region
    _
  $region13: #{mzkbert_forward.1} parent=0 // pred_fallthru
    _
  // Predicated region
  $region14: #{mzkbert_forward.1} parent=0 // pred_check
    _
  $region15: #{mzkbert_forward.1} parent=0 // pred_check_branch
    %19 = sbr.rel (0) target = $region17
  $region16: #{mzkbert_forward.1} parent=0 // pred_region
    _
  $region17: #{mzkbert_forward.1} parent=0 // pred_fallthru
    _
  // Predicated region
  $region18: #{mzkbert_forward.1} parent=0 // pred_check
    _
  $region19: #{mzkbert_forward.1} parent=0 // pred_check_branch
    %21 = sbr.rel (0) target = $region21
  $region20: #{mzkbert_forward.1} parent=0 // pred_region
    _
  $region21: #{mzkbert_forward.1} parent=0 // pred_fallthru
    _
  // Predicated region
  $region22: #{mzkbert_forward.1} parent=0 // pred_check
    _
  $region23: #{mzkbert_forward.1} parent=0 // pred_check_branch
    %23 = sbr.rel (0) target = $region25
  $region24: #{mzkbert_forward.1} parent=0 // pred_region
    _
  $region25: #{mzkbert_forward.1} parent=0 // pred_fallthru
    _
  // Predicated region
  $region26: #{mzkbert_forward.1} parent=0 // pred_check
    _
  $region27: #{mzkbert_forward.1} parent=0 // pred_check_branch
    %25 = sbr.rel (0) target = $region29
  $region28: #{mzkbert_forward.1} parent=0 // pred_region
    _
  $region29: #{mzkbert_forward.1} parent=0 // pred_fallthru
    _
  %v27 = vld [vmem:[%s0] sm:$0xff]
  %v28 = vld [vmem:[%s0 + $0x8] sm:$0xff]
  %v29 = vld [vmem:[%s0 + $0x10] sm:$0xff]
  %v30 = vld [vmem:[%s0 + $0x18] sm:$0xff]
  %v31 = vld [vmem:[%s0 + $0x20] sm:$0xff]
  %v32 = vld [vmem:[%s0 + $0x28] sm:$0xff]
  %v33 = vld [vmem:[%s1] sm:$0xff]
  %v34 = vld [vmem:[%s1 + $0x8] sm:$0xff]
  %v35 = vld [vmem:[%s1 + $0x10] sm:$0xff]
  %v36 = vld [vmem:[%s1 + $0x18] sm:$0xff]
  %v37 = vld [vmem:[%s1 + $0x20] sm:$0xff]
  %v38 = vld [vmem:[%s1 + $0x28] sm:$0xff]
  %v39 = vld [vmem:[%s1 + $0x30] sm:$0xff]
  %v40 = vld [vmem:[%s1 + $0x38] sm:$0xff]
  %v41 = vld [vmem:[%s1 + $0x40] sm:$0xff]
  %v42 = vld [vmem:[%s1 + $0x48] sm:$0xff]
  %v43 = vld [vmem:[%s1 + $0x50] sm:$0xff]
  %v44 = vld [vmem:[%s1 + $0x58] sm:$0xff]
  %v45 = vld [vmem:[%s1 + $0x60] sm:$0xff]
  %v46 = vld [vmem:[%s1 + $0x68] sm:$0xff]
  %v47 = vld [vmem:[%s1 + $0x70] sm:$0xff]
  %v48 = vld [vmem:[%s1 + $0x78] sm:$0xff]
  %v49 = vld [vmem:[%s1 + $0x80] sm:$0xff]
  %v50 = vld [vmem:[%s1 + $0x88] sm:$0xff]
  %v51 = vld [vmem:[%s1 + $0x90] sm:$0xff]
  %v52 = vld [vmem:[%s1 + $0x98] sm:$0xff]
  %v53 = vld [vmem:[%s1 + $0xa0] sm:$0xff]
  %v54 = vld [vmem:[%s1 + $0xa8] sm:$0xff]
  %v55 = vld [vmem:[%s1 + $0xb0] sm:$0xff]
  %v56 = vld [vmem:[%s1 + $0xb8] sm:$0xff]
  %v57 = vld [vmem:[%s1 + $0xc0] sm:$0xff]
  %v58 = vld [vmem:[%s1 + $0xc8] sm:$0xff]
  %v59 = vld [vmem:[%s1 + $0xd0] sm:$0xff]
  %v60 = vld [vmem:[%s1 + $0xd8] sm:$0xff]
  %v61 = vld [vmem:[%s1 + $0xe0] sm:$0xff]
  %v62 = vld [vmem:[%s1 + $0xe8] sm:$0xff]
  %v63 = vld [vmem:[%s1 + $0xf0] sm:$0xff]
  %v64 = vld [vmem:[%s1 + $0xf8] sm:$0xff]
  %v65 = vld [vmem:[%s1 + $0x100] sm:$0xff]
  %v66 = vld [vmem:[%s1 + $0x108] sm:$0xff]
  %v67 = vld [vmem:[%s1 + $0x110] sm:$0xff]
  %v68 = vld [vmem:[%s1 + $0x118] sm:$0xff]
  %v69 = vld [vmem:[%s1 + $0x120] sm:$0xff]
  %v70 = vld [vmem:[%s1 + $0x128] sm:$0xff]
  %v71 = vld [vmem:[%s1 + $0x130] sm:$0xff]
  %v72 = vld [vmem:[%s1 + $0x138] sm:$0xff]
  %v73 = vld [vmem:[%s1 + $0x140] sm:$0xff]
  %v74 = vld [vmem:[%s1 + $0x148] sm:$0xff]
  %v75 = vld [vmem:[%s1 + $0x150] sm:$0xff]
  %v76 = vld [vmem:[%s1 + $0x158] sm:$0xff]
  %v77 = vld [vmem:[%s1 + $0x160] sm:$0xff]
  %v78 = vld [vmem:[%s1 + $0x168] sm:$0xff]
  %v79 = vld [vmem:[%s1 + $0x170] sm:$0xff]
  %v80 = vld [vmem:[%s1 + $0x178] sm:$0xff]
  %v81 = vld [vmem:[%s1 + $0x180] sm:$0xff]
  %v82 = vld [vmem:[%s1 + $0x188] sm:$0xff]
  %v83 = vld [vmem:[%s1 + $0x190] sm:$0xff]
  %v84 = vld [vmem:[%s1 + $0x198] sm:$0xff]
  %v85 = vld [vmem:[%s1 + $0x1a0] sm:$0xff]
  %v86 = vld [vmem:[%s1 + $0x1a8] sm:$0xff]
  %v87 = vld [vmem:[%s1 + $0x1b0] sm:$0xff]
  %v88 = vld [vmem:[%s1 + $0x1b8] sm:$0xff]
  %v89 = vld [vmem:[%s1 + $0x1c0] sm:$0xff]
  %v90 = vld [vmem:[%s1 + $0x1c8] sm:$0xff]
  %v91 = vld [vmem:[%s1 + $0x1d0] sm:$0xff]
  %v92 = vld [vmem:[%s1 + $0x1d8] sm:$0xff]
  %v93 = vld [vmem:[%s1 + $0x1e0] sm:$0xff]
  %v94 = vld [vmem:[%s1 + $0x1e8] sm:$0xff]
  %v95 = vld [vmem:[%s1 + $0x1f0] sm:$0xff]
  %v96 = vld [vmem:[%s1 + $0x1f8] sm:$0xff]
  %v97 = vld [vmem:[%s1 + $0x200] sm:$0xff]
  %v98 = vld [vmem:[%s1 + $0x208] sm:$0xff]
  %v99 = vld [vmem:[%s1 + $0x210] sm:$0xff]
  %v100 = vld [vmem:[%s1 + $0x218] sm:$0xff]
  %v101 = vld [vmem:[%s1 + $0x220] sm:$0xff]
  %v102 = vld [vmem:[%s1 + $0x228] sm:$0xff]
  %v103 = vld [vmem:[%s1 + $0x230] sm:$0xff]
  %v104 = vld [vmem:[%s1 + $0x238] sm:$0xff]
  %v105 = vld [vmem:[%s1 + $0x240] sm:$0xff]
  %v106 = vld [vmem:[%s1 + $0x248] sm:$0xff]
  %v107 = vld [vmem:[%s1 + $0x250] sm:$0xff]
  %v108 = vld [vmem:[%s1 + $0x258] sm:$0xff]
  %v109 = vld [vmem:[%s1 + $0x260] sm:$0xff]
  %v110 = vld [vmem:[%s1 + $0x268] sm:$0xff]
  %v111 = vld [vmem:[%s1 + $0x270] sm:$0xff]
  %v112 = vld [vmem:[%s1 + $0x278] sm:$0xff]
  %v113 = vld [vmem:[%s1 + $0x280] sm:$0xff]
  %v114 = vld [vmem:[%s1 + $0x288] sm:$0xff]
  %v115 = vld [vmem:[%s1 + $0x290] sm:$0xff]
  %v116 = vld [vmem:[%s1 + $0x298] sm:$0xff]
  %v117 = vld [vmem:[%s1 + $0x2a0] sm:$0xff]
  %v118 = vld [vmem:[%s1 + $0x2a8] sm:$0xff]
  %v119 = vld [vmem:[%s1 + $0x2b0] sm:$0xff]
  %v120 = vld [vmem:[%s1 + $0x2b8] sm:$0xff]
  %v121 = vld [vmem:[%s1 + $0x2c0] sm:$0xff]
  %v122 = vld [vmem:[%s1 + $0x2c8] sm:$0xff]
  %v123 = vld [vmem:[%s1 + $0x2d0] sm:$0xff]
  %v124 = vld [vmem:[%s1 + $0x2d8] sm:$0xff]
  %v125 = vld [vmem:[%s1 + $0x2e0] sm:$0xff]
  %v126 = vld [vmem:[%s1 + $0x2e8] sm:$0xff]
  %v127 = vld [vmem:[%s1 + $0x2f0] sm:$0xff]
  %v128 = vld [vmem:[%s1 + $0x2f8] sm:$0xff]
  %v129 = vld [vmem:[%s1 + $0x300] sm:$0xff]
  %v130 = vld [vmem:[%s1 + $0x308] sm:$0xff]
  %v131 = vld [vmem:[%s1 + $0x310] sm:$0xff]
  %v132 = vld [vmem:[%s1 + $0x318] sm:$0xff]
  %v133 = vld [vmem:[%s1 + $0x320] sm:$0xff]
  %v134 = vld [vmem:[%s1 + $0x328] sm:$0xff]
  %v135 = vld [vmem:[%s1 + $0x330] sm:$0xff]
  %v136 = vld [vmem:[%s1 + $0x338] sm:$0xff]
  %v137 = vld [vmem:[%s1 + $0x340] sm:$0xff]
  %v138 = vld [vmem:[%s1 + $0x348] sm:$0xff]
  %v139 = vld [vmem:[%s1 + $0x350] sm:$0xff]
  %v140 = vld [vmem:[%s1 + $0x358] sm:$0xff]
  %v141 = vld [vmem:[%s1 + $0x360] sm:$0xff]
  %v142 = vld [vmem:[%s1 + $0x368] sm:$0xff]
  %v143 = vld [vmem:[%s1 + $0x370] sm:$0xff]
  %v144 = vld [vmem:[%s1 + $0x378] sm:$0xff]
  %v145 = vld [vmem:[%s1 + $0x380] sm:$0xff]
  %v146 = vld [vmem:[%s1 + $0x388] sm:$0xff]
  %v147 = vld [vmem:[%s1 + $0x390] sm:$0xff]
  %v148 = vld [vmem:[%s1 + $0x398] sm:$0xff]
  %v149 = vld [vmem:[%s1 + $0x3a0] sm:$0xff]
  %v150 = vld [vmem:[%s1 + $0x3a8] sm:$0xff]
  %v151 = vld [vmem:[%s1 + $0x3b0] sm:$0xff]
  %v152 = vld [vmem:[%s1 + $0x3b8] sm:$0xff]
  %v153 = vld [vmem:[%s1 + $0x3c0] sm:$0xff]
  %v154 = vld [vmem:[%s1 + $0x3c8] sm:$0xff]
  %v155 = vld [vmem:[%s1 + $0x3d0] sm:$0xff]
  %v156 = vld [vmem:[%s1 + $0x3d8] sm:$0xff]
  %v157 = vld [vmem:[%s1 + $0x3e0] sm:$0xff]
  %v158 = vld [vmem:[%s1 + $0x3e8] sm:$0xff]
  %v159 = vld [vmem:[%s1 + $0x3f0] sm:$0xff]
  %v160 = vld [vmem:[%s1 + $0x3f8] sm:$0xff]
  %v161 = vld [vmem:[%s1 + $0x400] sm:$0xff]
  %v162 = vld [vmem:[%s1 + $0x408] sm:$0xff]
  %v163 = vld [vmem:[%s1 + $0x410] sm:$0xff]
  %v164 = vld [vmem:[%s1 + $0x418] sm:$0xff]
  %v165 = vld [vmem:[%s1 + $0x420] sm:$0xff]
  %v166 = vld [vmem:[%s1 + $0x428] sm:$0xff]
  %v167 = vld [vmem:[%s1 + $0x430] sm:$0xff]
  %v168 = vld [vmem:[%s1 + $0x438] sm:$0xff]
  %v169 = vld [vmem:[%s1 + $0x440] sm:$0xff]
  %v170 = vld [vmem:[%s1 + $0x448] sm:$0xff]
  %v171 = vld [vmem:[%s1 + $0x450] sm:$0xff]
  %v172 = vld [vmem:[%s1 + $0x458] sm:$0xff]
  %v173 = vld [vmem:[%s1 + $0x460] sm:$0xff]
  %v174 = vld [vmem:[%s1 + $0x468] sm:$0xff]
  %v175 = vld [vmem:[%s1 + $0x470] sm:$0xff]
  %v176 = vld [vmem:[%s1 + $0x478] sm:$0xff]
  %v177 = vld [vmem:[%s1 + $0x480] sm:$0xff]
  %v178 = vld [vmem:[%s1 + $0x488] sm:$0xff]
  %v179 = vld [vmem:[%s1 + $0x490] sm:$0xff]
  %v180 = vld [vmem:[%s1 + $0x498] sm:$0xff]
  %v181 = vld [vmem:[%s1 + $0x4a0] sm:$0xff]
  %v182 = vld [vmem:[%s1 + $0x4a8] sm:$0xff]
  %v183 = vld [vmem:[%s1 + $0x4b0] sm:$0xff]
  %v184 = vld [vmem:[%s1 + $0x4b8] sm:$0xff]
  %v185 = vld [vmem:[%s1 + $0x4c0] sm:$0xff]
  %v186 = vld [vmem:[%s1 + $0x4c8] sm:$0xff]
  %v187 = vld [vmem:[%s1 + $0x4d0] sm:$0xff]
  %v188 = vld [vmem:[%s1 + $0x4d8] sm:$0xff]
  %v189 = vld [vmem:[%s1 + $0x4e0] sm:$0xff]
  %v190 = vld [vmem:[%s1 + $0x4e8] sm:$0xff]
  %v191 = vld [vmem:[%s1 + $0x4f0] sm:$0xff]
  %v192 = vld [vmem:[%s1 + $0x4f8] sm:$0xff]
  %v193 = vld [vmem:[%s1 + $0x500] sm:$0xff]
  %v194 = vld [vmem:[%s1 + $0x508] sm:$0xff]
  %v195 = vld [vmem:[%s1 + $0x510] sm:$0xff]
  %v196 = vld [vmem:[%s1 + $0x518] sm:$0xff]
  %v197 = vld [vmem:[%s1 + $0x520] sm:$0xff]
  %v198 = vld [vmem:[%s1 + $0x528] sm:$0xff]
  %v199 = vld [vmem:[%s1 + $0x530] sm:$0xff]
  %v200 = vld [vmem:[%s1 + $0x538] sm:$0xff]
  %v201 = vld [vmem:[%s1 + $0x540] sm:$0xff]
  %v202 = vld [vmem:[%s1 + $0x548] sm:$0xff]
  %v203 = vld [vmem:[%s1 + $0x550] sm:$0xff]
  %v204 = vld [vmem:[%s1 + $0x558] sm:$0xff]
  %v205 = vld [vmem:[%s1 + $0x560] sm:$0xff]
  %v206 = vld [vmem:[%s1 + $0x568] sm:$0xff]
  %v207 = vld [vmem:[%s1 + $0x570] sm:$0xff]
  %v208 = vld [vmem:[%s1 + $0x578] sm:$0xff]
  %v209 = vld [vmem:[%s1 + $0x580] sm:$0xff]
  %v210 = vld [vmem:[%s1 + $0x588] sm:$0xff]
  %v211 = vld [vmem:[%s1 + $0x590] sm:$0xff]
  %v212 = vld [vmem:[%s1 + $0x598] sm:$0xff]
  %v213 = vld [vmem:[%s1 + $0x5a0] sm:$0xff]
  %v214 = vld [vmem:[%s1 + $0x5a8] sm:$0xff]
  %v215 = vld [vmem:[%s1 + $0x5b0] sm:$0xff]
  %v216 = vld [vmem:[%s1 + $0x5b8] sm:$0xff]
  %v217 = vld [vmem:[%s1 + $0x5c0] sm:$0xff]
  %v218 = vld [vmem:[%s1 + $0x5c8] sm:$0xff]
  %v219 = vld [vmem:[%s1 + $0x5d0] sm:$0xff]
  %v220 = vld [vmem:[%s1 + $0x5d8] sm:$0xff]
  %v221 = vld [vmem:[%s1 + $0x5e0] sm:$0xff]
  %v222 = vld [vmem:[%s1 + $0x5e8] sm:$0xff]
  %v223 = vld [vmem:[%s1 + $0x5f0] sm:$0xff]
  %v224 = vld [vmem:[%s1 + $0x5f8] sm:$0xff]
  %v225 = vld [vmem:[%s2] sm:$0xf]
  %v227 = vlaneseq
  %v228 = vshrl.u32 %v227, 7
  %v229 = vsub.s32 0, %v228
  %v230 = vrot.slane %v225, %v229
  %v231 = vlaneseq
  %v232 = vshrl.u32 %v231, 7
  %v233 = vsub.s32 1, %v232
  %v234 = vrot.slane %v225, %v233
  %v235 = vlaneseq
  %v236 = vshrl.u32 %v235, 7
  %v237 = vsub.s32 2, %v236
  %v238 = vrot.slane %v225, %v237
  %v239 = vlaneseq
  %v240 = vshrl.u32 %v239, 7
  %v241 = vsub.s32 3, %v240
  %v242 = vrot.slane %v225, %v241
  %v253 = vunpack.c.l.b16 %v27
  %v254 = vunpack.c.h.b16 %v27
  %v255 = vunpack.c.l.b16 %v28
  %v256 = vunpack.c.h.b16 %v28
  %v257 = vunpack.c.l.b16 %v29
  %v258 = vunpack.c.h.b16 %v29
  %v259 = vunpack.c.l.b16 %v30
  %v260 = vunpack.c.h.b16 %v30
  %v261 = vunpack.c.l.b16 %v31
  %v262 = vunpack.c.h.b16 %v31
  %v263 = vunpack.c.l.b16 %v32
  %v264 = vunpack.c.h.b16 %v32
  %v265 = vpack.c.b16 %v259, %v253
  %v266 = vpack.c.b16 %v260, %v254
  %v267 = vpack.c.b16 %v261, %v255
  %v268 = vpack.c.b16 %v262, %v256
  %v269 = vpack.c.b16 %v263, %v257
  %v270 = vpack.c.b16 %v264, %v258
  %v469 = vunpack.c.l.b16 %v33
  %v470 = vunpack.c.h.b16 %v33
  %v471 = vunpack.c.l.b16 %v34
  %v472 = vunpack.c.h.b16 %v34
  %v473 = vunpack.c.l.b16 %v35
  %v474 = vunpack.c.h.b16 %v35
  %v475 = vunpack.c.l.b16 %v36
  %v476 = vunpack.c.h.b16 %v36
  %v477 = vunpack.c.l.b16 %v37
  %v478 = vunpack.c.h.b16 %v37
  %v479 = vunpack.c.l.b16 %v38
  %v480 = vunpack.c.h.b16 %v38
  %v481 = vunpack.c.l.b16 %v39
  %v482 = vunpack.c.h.b16 %v39
  %v483 = vunpack.c.l.b16 %v40
  %v484 = vunpack.c.h.b16 %v40
  %v485 = vunpack.c.l.b16 %v41
  %v486 = vunpack.c.h.b16 %v41
  %v487 = vunpack.c.l.b16 %v42
  %v488 = vunpack.c.h.b16 %v42
  %v489 = vunpack.c.l.b16 %v43
  %v490 = vunpack.c.h.b16 %v43
  %v491 = vunpack.c.l.b16 %v44
  %v492 = vunpack.c.h.b16 %v44
  %v493 = vunpack.c.l.b16 %v45
  %v494 = vunpack.c.h.b16 %v45
  %v495 = vunpack.c.l.b16 %v46
  %v496 = vunpack.c.h.b16 %v46
  %v497 = vunpack.c.l.b16 %v47
  %v498 = vunpack.c.h.b16 %v47
  %v499 = vunpack.c.l.b16 %v48
  %v500 = vunpack.c.h.b16 %v48
  %v501 = vunpack.c.l.b16 %v49
  %v502 = vunpack.c.h.b16 %v49
  %v503 = vunpack.c.l.b16 %v50
  %v504 = vunpack.c.h.b16 %v50
  %v505 = vunpack.c.l.b16 %v51
  %v506 = vunpack.c.h.b16 %v51
  %v507 = vunpack.c.l.b16 %v52
  %v508 = vunpack.c.h.b16 %v52
  %v509 = vunpack.c.l.b16 %v53
  %v510 = vunpack.c.h.b16 %v53
  %v511 = vunpack.c.l.b16 %v54
  %v512 = vunpack.c.h.b16 %v54
  %v513 = vunpack.c.l.b16 %v55
  %v514 = vunpack.c.h.b16 %v55
  %v515 = vunpack.c.l.b16 %v56
  %v516 = vunpack.c.h.b16 %v56
  %v517 = vunpack.c.l.b16 %v57
  %v518 = vunpack.c.h.b16 %v57
  %v519 = vunpack.c.l.b16 %v58
  %v520 = vunpack.c.h.b16 %v58
  %v521 = vunpack.c.l.b16 %v59
  %v522 = vunpack.c.h.b16 %v59
  %v523 = vunpack.c.l.b16 %v60
  %v524 = vunpack.c.h.b16 %v60
  %v525 = vunpack.c.l.b16 %v61
  %v526 = vunpack.c.h.b16 %v61
  %v527 = vunpack.c.l.b16 %v62
  %v528 = vunpack.c.h.b16 %v62
  %v529 = vunpack.c.l.b16 %v63
  %v530 = vunpack.c.h.b16 %v63
  %v531 = vunpack.c.l.b16 %v64
  %v532 = vunpack.c.h.b16 %v64
  %v533 = vunpack.c.l.b16 %v65
  %v534 = vunpack.c.h.b16 %v65
  %v535 = vunpack.c.l.b16 %v66
  %v536 = vunpack.c.h.b16 %v66
  %v537 = vunpack.c.l.b16 %v67
  %v538 = vunpack.c.h.b16 %v67
  %v539 = vunpack.c.l.b16 %v68
  %v540 = vunpack.c.h.b16 %v68
  %v541 = vunpack.c.l.b16 %v69
  %v542 = vunpack.c.h.b16 %v69
  %v543 = vunpack.c.l.b16 %v70
  %v544 = vunpack.c.h.b16 %v70
  %v545 = vunpack.c.l.b16 %v71
  %v546 = vunpack.c.h.b16 %v71
  %v547 = vunpack.c.l.b16 %v72
  %v548 = vunpack.c.h.b16 %v72
  %v549 = vunpack.c.l.b16 %v73
  %v550 = vunpack.c.h.b16 %v73
  %v551 = vunpack.c.l.b16 %v74
  %v552 = vunpack.c.h.b16 %v74
  %v553 = vunpack.c.l.b16 %v75
  %v554 = vunpack.c.h.b16 %v75
  %v555 = vunpack.c.l.b16 %v76
  %v556 = vunpack.c.h.b16 %v76
  %v557 = vunpack.c.l.b16 %v77
  %v558 = vunpack.c.h.b16 %v77
  %v559 = vunpack.c.l.b16 %v78
  %v560 = vunpack.c.h.b16 %v78
  %v561 = vunpack.c.l.b16 %v79
  %v562 = vunpack.c.h.b16 %v79
  %v563 = vunpack.c.l.b16 %v80
  %v564 = vunpack.c.h.b16 %v80
  %v565 = vunpack.c.l.b16 %v81
  %v566 = vunpack.c.h.b16 %v81
  %v567 = vunpack.c.l.b16 %v82
  %v568 = vunpack.c.h.b16 %v82
  %v569 = vunpack.c.l.b16 %v83
  %v570 = vunpack.c.h.b16 %v83
  %v571 = vunpack.c.l.b16 %v84
  %v572 = vunpack.c.h.b16 %v84
  %v573 = vunpack.c.l.b16 %v85
  %v574 = vunpack.c.h.b16 %v85
  %v575 = vunpack.c.l.b16 %v86
  %v576 = vunpack.c.h.b16 %v86
  %v577 = vunpack.c.l.b16 %v87
  %v578 = vunpack.c.h.b16 %v87
  %v579 = vunpack.c.l.b16 %v88
  %v580 = vunpack.c.h.b16 %v88
  %v581 = vunpack.c.l.b16 %v89
  %v582 = vunpack.c.h.b16 %v89
  %v583 = vunpack.c.l.b16 %v90
  %v584 = vunpack.c.h.b16 %v90
  %v585 = vunpack.c.l.b16 %v91
  %v586 = vunpack.c.h.b16 %v91
  %v587 = vunpack.c.l.b16 %v92
  %v588 = vunpack.c.h.b16 %v92
  %v589 = vunpack.c.l.b16 %v93
  %v590 = vunpack.c.h.b16 %v93
  %v591 = vunpack.c.l.b16 %v94
  %v592 = vunpack.c.h.b16 %v94
  %v593 = vunpack.c.l.b16 %v95
  %v594 = vunpack.c.h.b16 %v95
  %v595 = vunpack.c.l.b16 %v96
  %v596 = vunpack.c.h.b16 %v96
  %v597 = vunpack.c.l.b16 %v97
  %v598 = vunpack.c.h.b16 %v97
  %v599 = vunpack.c.l.b16 %v98
  %v600 = vunpack.c.h.b16 %v98
  %v601 = vunpack.c.l.b16 %v99
  %v602 = vunpack.c.h.b16 %v99
  %v603 = vunpack.c.l.b16 %v100
  %v604 = vunpack.c.h.b16 %v100
  %v605 = vunpack.c.l.b16 %v101
  %v606 = vunpack.c.h.b16 %v101
  %v607 = vunpack.c.l.b16 %v102
  %v608 = vunpack.c.h.b16 %v102
  %v609 = vunpack.c.l.b16 %v103
  %v610 = vunpack.c.h.b16 %v103
  %v611 = vunpack.c.l.b16 %v104
  %v612 = vunpack.c.h.b16 %v104
  %v613 = vunpack.c.l.b16 %v105
  %v614 = vunpack.c.h.b16 %v105
  %v615 = vunpack.c.l.b16 %v106
  %v616 = vunpack.c.h.b16 %v106
  %v617 = vunpack.c.l.b16 %v107
  %v618 = vunpack.c.h.b16 %v107
  %v619 = vunpack.c.l.b16 %v108
  %v620 = vunpack.c.h.b16 %v108
  %v621 = vunpack.c.l.b16 %v109
  %v622 = vunpack.c.h.b16 %v109
  %v623 = vunpack.c.l.b16 %v110
  %v624 = vunpack.c.h.b16 %v110
  %v625 = vunpack.c.l.b16 %v111
  %v626 = vunpack.c.h.b16 %v111
  %v627 = vunpack.c.l.b16 %v112
  %v628 = vunpack.c.h.b16 %v112
  %v629 = vunpack.c.l.b16 %v113
  %v630 = vunpack.c.h.b16 %v113
  %v631 = vunpack.c.l.b16 %v114
  %v632 = vunpack.c.h.b16 %v114
  %v633 = vunpack.c.l.b16 %v115
  %v634 = vunpack.c.h.b16 %v115
  %v635 = vunpack.c.l.b16 %v116
  %v636 = vunpack.c.h.b16 %v116
  %v637 = vunpack.c.l.b16 %v117
  %v638 = vunpack.c.h.b16 %v117
  %v639 = vunpack.c.l.b16 %v118
  %v640 = vunpack.c.h.b16 %v118
  %v641 = vunpack.c.l.b16 %v119
  %v642 = vunpack.c.h.b16 %v119
  %v643 = vunpack.c.l.b16 %v120
  %v644 = vunpack.c.h.b16 %v120
  %v645 = vunpack.c.l.b16 %v121
  %v646 = vunpack.c.h.b16 %v121
  %v647 = vunpack.c.l.b16 %v122
  %v648 = vunpack.c.h.b16 %v122
  %v649 = vunpack.c.l.b16 %v123
  %v650 = vunpack.c.h.b16 %v123
  %v651 = vunpack.c.l.b16 %v124
  %v652 = vunpack.c.h.b16 %v124
  %v653 = vunpack.c.l.b16 %v125
  %v654 = vunpack.c.h.b16 %v125
  %v655 = vunpack.c.l.b16 %v126
  %v656 = vunpack.c.h.b16 %v126
  %v657 = vunpack.c.l.b16 %v127
  %v658 = vunpack.c.h.b16 %v127
  %v659 = vunpack.c.l.b16 %v128
  %v660 = vunpack.c.h.b16 %v128
  %v661 = vunpack.c.l.b16 %v129
  %v662 = vunpack.c.h.b16 %v129
  %v663 = vunpack.c.l.b16 %v130
  %v664 = vunpack.c.h.b16 %v130
  %v665 = vunpack.c.l.b16 %v131
  %v666 = vunpack.c.h.b16 %v131
  %v667 = vunpack.c.l.b16 %v132
  %v668 = vunpack.c.h.b16 %v132
  %v669 = vunpack.c.l.b16 %v133
  %v670 = vunpack.c.h.b16 %v133
  %v671 = vunpack.c.l.b16 %v134
  %v672 = vunpack.c.h.b16 %v134
  %v673 = vunpack.c.l.b16 %v135
  %v674 = vunpack.c.h.b16 %v135
  %v675 = vunpack.c.l.b16 %v136
  %v676 = vunpack.c.h.b16 %v136
  %v677 = vunpack.c.l.b16 %v137
  %v678 = vunpack.c.h.b16 %v137
  %v679 = vunpack.c.l.b16 %v138
  %v680 = vunpack.c.h.b16 %v138
  %v681 = vunpack.c.l.b16 %v139
  %v682 = vunpack.c.h.b16 %v139
  %v683 = vunpack.c.l.b16 %v140
  %v684 = vunpack.c.h.b16 %v140
  %v685 = vunpack.c.l.b16 %v141
  %v686 = vunpack.c.h.b16 %v141
  %v687 = vunpack.c.l.b16 %v142
  %v688 = vunpack.c.h.b16 %v142
  %v689 = vunpack.c.l.b16 %v143
  %v690 = vunpack.c.h.b16 %v143
  %v691 = vunpack.c.l.b16 %v144
  %v692 = vunpack.c.h.b16 %v144
  %v693 = vunpack.c.l.b16 %v145
  %v694 = vunpack.c.h.b16 %v145
  %v695 = vunpack.c.l.b16 %v146
  %v696 = vunpack.c.h.b16 %v146
  %v697 = vunpack.c.l.b16 %v147
  %v698 = vunpack.c.h.b16 %v147
  %v699 = vunpack.c.l.b16 %v148
  %v700 = vunpack.c.h.b16 %v148
  %v701 = vunpack.c.l.b16 %v149
  %v702 = vunpack.c.h.b16 %v149
  %v703 = vunpack.c.l.b16 %v150
  %v704 = vunpack.c.h.b16 %v150
  %v705 = vunpack.c.l.b16 %v151
  %v706 = vunpack.c.h.b16 %v151
  %v707 = vunpack.c.l.b16 %v152
  %v708 = vunpack.c.h.b16 %v152
  %v709 = vunpack.c.l.b16 %v153
  %v710 = vunpack.c.h.b16 %v153
  %v711 = vunpack.c.l.b16 %v154
  %v712 = vunpack.c.h.b16 %v154
  %v713 = vunpack.c.l.b16 %v155
  %v714 = vunpack.c.h.b16 %v155
  %v715 = vunpack.c.l.b16 %v156
  %v716 = vunpack.c.h.b16 %v156
  %v717 = vunpack.c.l.b16 %v157
  %v718 = vunpack.c.h.b16 %v157
  %v719 = vunpack.c.l.b16 %v158
  %v720 = vunpack.c.h.b16 %v158
  %v721 = vunpack.c.l.b16 %v159
  %v722 = vunpack.c.h.b16 %v159
  %v723 = vunpack.c.l.b16 %v160
  %v724 = vunpack.c.h.b16 %v160
  %v725 = vunpack.c.l.b16 %v161
  %v726 = vunpack.c.h.b16 %v161
  %v727 = vunpack.c.l.b16 %v162
  %v728 = vunpack.c.h.b16 %v162
  %v729 = vunpack.c.l.b16 %v163
  %v730 = vunpack.c.h.b16 %v163
  %v731 = vunpack.c.l.b16 %v164
  %v732 = vunpack.c.h.b16 %v164
  %v733 = vunpack.c.l.b16 %v165
  %v734 = vunpack.c.h.b16 %v165
  %v735 = vunpack.c.l.b16 %v166
  %v736 = vunpack.c.h.b16 %v166
  %v737 = vunpack.c.l.b16 %v167
  %v738 = vunpack.c.h.b16 %v167
  %v739 = vunpack.c.l.b16 %v168
  %v740 = vunpack.c.h.b16 %v168
  %v741 = vunpack.c.l.b16 %v169
  %v742 = vunpack.c.h.b16 %v169
  %v743 = vunpack.c.l.b16 %v170
  %v744 = vunpack.c.h.b16 %v170
  %v745 = vunpack.c.l.b16 %v171
  %v746 = vunpack.c.h.b16 %v171
  %v747 = vunpack.c.l.b16 %v172
  %v748 = vunpack.c.h.b16 %v172
  %v749 = vunpack.c.l.b16 %v173
  %v750 = vunpack.c.h.b16 %v173
  %v751 = vunpack.c.l.b16 %v174
  %v752 = vunpack.c.h.b16 %v174
  %v753 = vunpack.c.l.b16 %v175
  %v754 = vunpack.c.h.b16 %v175
  %v755 = vunpack.c.l.b16 %v176
  %v756 = vunpack.c.h.b16 %v176
  %v757 = vunpack.c.l.b16 %v177
  %v758 = vunpack.c.h.b16 %v177
  %v759 = vunpack.c.l.b16 %v178
  %v760 = vunpack.c.h.b16 %v178
  %v761 = vunpack.c.l.b16 %v179
  %v762 = vunpack.c.h.b16 %v179
  %v763 = vunpack.c.l.b16 %v180
  %v764 = vunpack.c.h.b16 %v180
  %v765 = vunpack.c.l.b16 %v181
  %v766 = vunpack.c.h.b16 %v181
  %v767 = vunpack.c.l.b16 %v182
  %v768 = vunpack.c.h.b16 %v182
  %v769 = vunpack.c.l.b16 %v183
  %v770 = vunpack.c.h.b16 %v183
  %v771 = vunpack.c.l.b16 %v184
  %v772 = vunpack.c.h.b16 %v184
  %v773 = vunpack.c.l.b16 %v185
  %v774 = vunpack.c.h.b16 %v185
  %v775 = vunpack.c.l.b16 %v186
  %v776 = vunpack.c.h.b16 %v186
  %v777 = vunpack.c.l.b16 %v187
  %v778 = vunpack.c.h.b16 %v187
  %v779 = vunpack.c.l.b16 %v188
  %v780 = vunpack.c.h.b16 %v188
  %v781 = vunpack.c.l.b16 %v189
  %v782 = vunpack.c.h.b16 %v189
  %v783 = vunpack.c.l.b16 %v190
  %v784 = vunpack.c.h.b16 %v190
  %v785 = vunpack.c.l.b16 %v191
  %v786 = vunpack.c.h.b16 %v191
  %v787 = vunpack.c.l.b16 %v192
  %v788 = vunpack.c.h.b16 %v192
  %v789 = vunpack.c.l.b16 %v193
  %v790 = vunpack.c.h.b16 %v193
  %v791 = vunpack.c.l.b16 %v194
  %v792 = vunpack.c.h.b16 %v194
  %v793 = vunpack.c.l.b16 %v195
  %v794 = vunpack.c.h.b16 %v195
  %v795 = vunpack.c.l.b16 %v196
  %v796 = vunpack.c.h.b16 %v196
  %v797 = vunpack.c.l.b16 %v197
  %v798 = vunpack.c.h.b16 %v197
  %v799 = vunpack.c.l.b16 %v198
  %v800 = vunpack.c.h.b16 %v198
  %v801 = vunpack.c.l.b16 %v199
  %v802 = vunpack.c.h.b16 %v199
  %v803 = vunpack.c.l.b16 %v200
  %v804 = vunpack.c.h.b16 %v200
  %v805 = vunpack.c.l.b16 %v201
  %v806 = vunpack.c.h.b16 %v201
  %v807 = vunpack.c.l.b16 %v202
  %v808 = vunpack.c.h.b16 %v202
  %v809 = vunpack.c.l.b16 %v203
  %v810 = vunpack.c.h.b16 %v203
  %v811 = vunpack.c.l.b16 %v204
  %v812 = vunpack.c.h.b16 %v204
  %v813 = vunpack.c.l.b16 %v205
  %v814 = vunpack.c.h.b16 %v205
  %v815 = vunpack.c.l.b16 %v206
  %v816 = vunpack.c.h.b16 %v206
  %v817 = vunpack.c.l.b16 %v207
  %v818 = vunpack.c.h.b16 %v207
  %v819 = vunpack.c.l.b16 %v208
  %v820 = vunpack.c.h.b16 %v208
  %v821 = vunpack.c.l.b16 %v209
  %v822 = vunpack.c.h.b16 %v209
  %v823 = vunpack.c.l.b16 %v210
  %v824 = vunpack.c.h.b16 %v210
  %v825 = vunpack.c.l.b16 %v211
  %v826 = vunpack.c.h.b16 %v211
  %v827 = vunpack.c.l.b16 %v212
  %v828 = vunpack.c.h.b16 %v212
  %v829 = vunpack.c.l.b16 %v213
  %v830 = vunpack.c.h.b16 %v213
  %v831 = vunpack.c.l.b16 %v214
  %v832 = vunpack.c.h.b16 %v214
  %v833 = vunpack.c.l.b16 %v215
  %v834 = vunpack.c.h.b16 %v215
  %v835 = vunpack.c.l.b16 %v216
  %v836 = vunpack.c.h.b16 %v216
  %v837 = vunpack.c.l.b16 %v217
  %v838 = vunpack.c.h.b16 %v217
  %v839 = vunpack.c.l.b16 %v218
  %v840 = vunpack.c.h.b16 %v218
  %v841 = vunpack.c.l.b16 %v219
  %v842 = vunpack.c.h.b16 %v219
  %v843 = vunpack.c.l.b16 %v220
  %v844 = vunpack.c.h.b16 %v220
  %v845 = vunpack.c.l.b16 %v221
  %v846 = vunpack.c.h.b16 %v221
  %v847 = vunpack.c.l.b16 %v222
  %v848 = vunpack.c.h.b16 %v222
  %v849 = vunpack.c.l.b16 %v223
  %v850 = vunpack.c.h.b16 %v223
  %v851 = vunpack.c.l.b16 %v224
  %v852 = vunpack.c.h.b16 %v224
  %v853 = vpack.c.b16 %v473, %v469
  %v854 = vpack.c.b16 %v474, %v470
  %v855 = vpack.c.b16 %v475, %v471
  %v856 = vpack.c.b16 %v476, %v472
  %v857 = vpack.c.b16 %v481, %v477
  %v858 = vpack.c.b16 %v482, %v478
  %v859 = vpack.c.b16 %v483, %v479
  %v860 = vpack.c.b16 %v484, %v480
  %v861 = vpack.c.b16 %v489, %v485
  %v862 = vpack.c.b16 %v490, %v486
  %v863 = vpack.c.b16 %v491, %v487
  %v864 = vpack.c.b16 %v492, %v488
  %v865 = vpack.c.b16 %v497, %v493
  %v866 = vpack.c.b16 %v498, %v494
  %v867 = vpack.c.b16 %v499, %v495
  %v868 = vpack.c.b16 %v500, %v496
  %v869 = vpack.c.b16 %v505, %v501
  %v870 = vpack.c.b16 %v506, %v502
  %v871 = vpack.c.b16 %v507, %v503
  %v872 = vpack.c.b16 %v508, %v504
  %v873 = vpack.c.b16 %v513, %v509
  %v874 = vpack.c.b16 %v514, %v510
  %v875 = vpack.c.b16 %v515, %v511
  %v876 = vpack.c.b16 %v516, %v512
  %v877 = vpack.c.b16 %v521, %v517
  %v878 = vpack.c.b16 %v522, %v518
  %v879 = vpack.c.b16 %v523, %v519
  %v880 = vpack.c.b16 %v524, %v520
  %v881 = vpack.c.b16 %v529, %v525
  %v882 = vpack.c.b16 %v530, %v526
  %v883 = vpack.c.b16 %v531, %v527
  %v884 = vpack.c.b16 %v532, %v528
  %v885 = vpack.c.b16 %v537, %v533
  %v886 = vpack.c.b16 %v538, %v534
  %v887 = vpack.c.b16 %v539, %v535
  %v888 = vpack.c.b16 %v540, %v536
  %v889 = vpack.c.b16 %v545, %v541
  %v890 = vpack.c.b16 %v546, %v542
  %v891 = vpack.c.b16 %v547, %v543
  %v892 = vpack.c.b16 %v548, %v544
  %v893 = vpack.c.b16 %v553, %v549
  %v894 = vpack.c.b16 %v554, %v550
  %v895 = vpack.c.b16 %v555, %v551
  %v896 = vpack.c.b16 %v556, %v552
  %v897 = vpack.c.b16 %v561, %v557
  %v898 = vpack.c.b16 %v562, %v558
  %v899 = vpack.c.b16 %v563, %v559
  %v900 = vpack.c.b16 %v564, %v560
  %v901 = vpack.c.b16 %v569, %v565
  %v902 = vpack.c.b16 %v570, %v566
  %v903 = vpack.c.b16 %v571, %v567
  %v904 = vpack.c.b16 %v572, %v568
  %v905 = vpack.c.b16 %v577, %v573
  %v906 = vpack.c.b16 %v578, %v574
  %v907 = vpack.c.b16 %v579, %v575
  %v908 = vpack.c.b16 %v580, %v576
  %v909 = vpack.c.b16 %v585, %v581
  %v910 = vpack.c.b16 %v586, %v582
  %v911 = vpack.c.b16 %v587, %v583
  %v912 = vpack.c.b16 %v588, %v584
  %v913 = vpack.c.b16 %v593, %v589
  %v914 = vpack.c.b16 %v594, %v590
  %v915 = vpack.c.b16 %v595, %v591
  %v916 = vpack.c.b16 %v596, %v592
  %v917 = vpack.c.b16 %v601, %v597
  %v918 = vpack.c.b16 %v602, %v598
  %v919 = vpack.c.b16 %v603, %v599
  %v920 = vpack.c.b16 %v604, %v600
  %v921 = vpack.c.b16 %v609, %v605
  %v922 = vpack.c.b16 %v610, %v606
  %v923 = vpack.c.b16 %v611, %v607
  %v924 = vpack.c.b16 %v612, %v608
  %v925 = vpack.c.b16 %v617, %v613
  %v926 = vpack.c.b16 %v618, %v614
  %v927 = vpack.c.b16 %v619, %v615
  %v928 = vpack.c.b16 %v620, %v616
  %v929 = vpack.c.b16 %v625, %v621
  %v930 = vpack.c.b16 %v626, %v622
  %v931 = vpack.c.b16 %v627, %v623
  %v932 = vpack.c.b16 %v628, %v624
  %v933 = vpack.c.b16 %v633, %v629
  %v934 = vpack.c.b16 %v634, %v630
  %v935 = vpack.c.b16 %v635, %v631
  %v936 = vpack.c.b16 %v636, %v632
  %v937 = vpack.c.b16 %v641, %v637
  %v938 = vpack.c.b16 %v642, %v638
  %v939 = vpack.c.b16 %v643, %v639
  %v940 = vpack.c.b16 %v644, %v640
  %v941 = vpack.c.b16 %v649, %v645
  %v942 = vpack.c.b16 %v650, %v646
  %v943 = vpack.c.b16 %v651, %v647
  %v944 = vpack.c.b16 %v652, %v648
  %v945 = vpack.c.b16 %v657, %v653
  %v946 = vpack.c.b16 %v658, %v654
  %v947 = vpack.c.b16 %v659, %v655
  %v948 = vpack.c.b16 %v660, %v656
  %v949 = vpack.c.b16 %v665, %v661
  %v950 = vpack.c.b16 %v666, %v662
  %v951 = vpack.c.b16 %v667, %v663
  %v952 = vpack.c.b16 %v668, %v664
  %v953 = vpack.c.b16 %v673, %v669
  %v954 = vpack.c.b16 %v674, %v670
  %v955 = vpack.c.b16 %v675, %v671
  %v956 = vpack.c.b16 %v676, %v672
  %v957 = vpack.c.b16 %v681, %v677
  %v958 = vpack.c.b16 %v682, %v678
  %v959 = vpack.c.b16 %v683, %v679
  %v960 = vpack.c.b16 %v684, %v680
  %v961 = vpack.c.b16 %v689, %v685
  %v962 = vpack.c.b16 %v690, %v686
  %v963 = vpack.c.b16 %v691, %v687
  %v964 = vpack.c.b16 %v692, %v688
  %v965 = vpack.c.b16 %v697, %v693
  %v966 = vpack.c.b16 %v698, %v694
  %v967 = vpack.c.b16 %v699, %v695
  %v968 = vpack.c.b16 %v700, %v696
  %v969 = vpack.c.b16 %v705, %v701
  %v970 = vpack.c.b16 %v706, %v702
  %v971 = vpack.c.b16 %v707, %v703
  %v972 = vpack.c.b16 %v708, %v704
  %v973 = vpack.c.b16 %v713, %v709
  %v974 = vpack.c.b16 %v714, %v710
  %v975 = vpack.c.b16 %v715, %v711
  %v976 = vpack.c.b16 %v716, %v712
  %v977 = vpack.c.b16 %v721, %v717
  %v978 = vpack.c.b16 %v722, %v718
  %v979 = vpack.c.b16 %v723, %v719
  %v980 = vpack.c.b16 %v724, %v720
  %v981 = vpack.c.b16 %v729, %v725
  %v982 = vpack.c.b16 %v730, %v726
  %v983 = vpack.c.b16 %v731, %v727
  %v984 = vpack.c.b16 %v732, %v728
  %v985 = vpack.c.b16 %v737, %v733
  %v986 = vpack.c.b16 %v738, %v734
  %v987 = vpack.c.b16 %v739, %v735
  %v988 = vpack.c.b16 %v740, %v736
  %v989 = vpack.c.b16 %v745, %v741
  %v990 = vpack.c.b16 %v746, %v742
  %v991 = vpack.c.b16 %v747, %v743
  %v992 = vpack.c.b16 %v748, %v744
  %v993 = vpack.c.b16 %v753, %v749
  %v994 = vpack.c.b16 %v754, %v750
  %v995 = vpack.c.b16 %v755, %v751
  %v996 = vpack.c.b16 %v756, %v752
  %v997 = vpack.c.b16 %v761, %v757
  %v998 = vpack.c.b16 %v762, %v758
  %v999 = vpack.c.b16 %v763, %v759
  %v1000 = vpack.c.b16 %v764, %v760
  %v1001 = vpack.c.b16 %v769, %v765
  %v1002 = vpack.c.b16 %v770, %v766
  %v1003 = vpack.c.b16 %v771, %v767
  %v1004 = vpack.c.b16 %v772, %v768
  %v1005 = vpack.c.b16 %v777, %v773
  %v1006 = vpack.c.b16 %v778, %v774
  %v1007 = vpack.c.b16 %v779, %v775
  %v1008 = vpack.c.b16 %v780, %v776
  %v1009 = vpack.c.b16 %v785, %v781
  %v1010 = vpack.c.b16 %v786, %v782
  %v1011 = vpack.c.b16 %v787, %v783
  %v1012 = vpack.c.b16 %v788, %v784
  %v1013 = vpack.c.b16 %v793, %v789
  %v1014 = vpack.c.b16 %v794, %v790
  %v1015 = vpack.c.b16 %v795, %v791
  %v1016 = vpack.c.b16 %v796, %v792
  %v1017 = vpack.c.b16 %v801, %v797
  %v1018 = vpack.c.b16 %v802, %v798
  %v1019 = vpack.c.b16 %v803, %v799
  %v1020 = vpack.c.b16 %v804, %v800
  %v1021 = vpack.c.b16 %v809, %v805
  %v1022 = vpack.c.b16 %v810, %v806
  %v1023 = vpack.c.b16 %v811, %v807
  %v1024 = vpack.c.b16 %v812, %v808
  %v1025 = vpack.c.b16 %v817, %v813
  %v1026 = vpack.c.b16 %v818, %v814
  %v1027 = vpack.c.b16 %v819, %v815
  %v1028 = vpack.c.b16 %v820, %v816
  %v1029 = vpack.c.b16 %v825, %v821
  %v1030 = vpack.c.b16 %v826, %v822
  %v1031 = vpack.c.b16 %v827, %v823
  %v1032 = vpack.c.b16 %v828, %v824
  %v1033 = vpack.c.b16 %v833, %v829
  %v1034 = vpack.c.b16 %v834, %v830
  %v1035 = vpack.c.b16 %v835, %v831
  %v1036 = vpack.c.b16 %v836, %v832
  %v1037 = vpack.c.b16 %v841, %v837
  %v1038 = vpack.c.b16 %v842, %v838
  %v1039 = vpack.c.b16 %v843, %v839
  %v1040 = vpack.c.b16 %v844, %v840
  %v1041 = vpack.c.b16 %v849, %v845
  %v1042 = vpack.c.b16 %v850, %v846
  %v1043 = vpack.c.b16 %v851, %v847
  %v1044 = vpack.c.b16 %v852, %v848
  %1237 = vmatprep.subr.bf16.mxu0 %v882
  %1238 = vmatpush1.bf16.msra.mxu0 %v881
  %1239 = vmatprep.subr.bf16.mxu0 %v878
  %1240 = vmatpush1.bf16.msra.mxu0 %v877
  %1241 = vmatprep.subr.bf16.mxu0 %v874
  %1242 = vmatpush1.bf16.msra.mxu0 %v873
  %1243 = vmatprep.subr.bf16.mxu0 %v870
  %1244 = vmatpush1.bf16.msra.mxu0 %v869
  %1245 = vmatprep.subr.bf16.mxu0 %v866
  %1246 = vmatpush1.bf16.msra.mxu0 %v865
  %1247 = vmatprep.subr.bf16.mxu0 %v862
  %1248 = vmatpush1.bf16.msra.mxu0 %v861
  %1249 = vmatprep.subr.bf16.mxu0 %v858
  %1250 = vmatpush1.bf16.msra.mxu0 %v857
  %1251 = vmatprep.subr.bf16.mxu0 %v854
  %1252 = vmatpush1.bf16.msra.mxu0 %v853
  %1253 = vmatprep.subr.bf16.mxu0 %v914
  %1254 = vmatpush2.bf16.msra.mxu0 %v913
  %1255 = vmatprep.subr.bf16.mxu0 %v910
  %1256 = vmatpush2.bf16.msra.mxu0 %v909
  %1257 = vmatprep.subr.bf16.mxu0 %v906
  %1258 = vmatpush2.bf16.msra.mxu0 %v905
  %1259 = vmatprep.subr.bf16.mxu0 %v902
  %1260 = vmatpush2.bf16.msra.mxu0 %v901
  %1261 = vmatprep.subr.bf16.mxu0 %v898
  %1262 = vmatpush2.bf16.msra.mxu0 %v897
  %1263 = vmatprep.subr.bf16.mxu0 %v894
  %1264 = vmatpush2.bf16.msra.mxu0 %v893
  %1265 = vmatprep.subr.bf16.mxu0 %v890
  %1266 = vmatpush2.bf16.msra.mxu0 %v889
  %1267 = vmatprep.subr.bf16.mxu0 %v886
  %1268 = vmatpush2.bf16.msra.mxu0 %v885
  %1269 = vmatprep.mubr.bf16.mxu0 %v266
  %1270 = vmatmul.mubr.bf16.gmra.mxu0 %v265
  %v1271 = vpop.f32.mrf.mxu0
  %v1272 = vadd.f32 %v230, %v1271
  %v1273 = vpop.f32.mrf.mxu0
  %v1274 = vadd.f32 %v234, %v1273
  %v1275 = vpop.f32.mrf.mxu0
  %v1276 = vadd.f32 %v230, %v1275
  %v1277 = vpop.f32.mrf.mxu0
  %v1278 = vadd.f32 %v234, %v1277
  %1279 = vdwg.mxu0
  %1280 = vmatprep.subr.bf16.mxu0 %v946
  %1281 = vmatpush1.bf16.msra.mxu0 %v945
  %1282 = vmatprep.subr.bf16.mxu0 %v942
  %1283 = vmatpush1.bf16.msra.mxu0 %v941
  %1284 = vmatprep.subr.bf16.mxu0 %v938
  %1285 = vmatpush1.bf16.msra.mxu0 %v937
  %1286 = vmatprep.subr.bf16.mxu0 %v934
  %1287 = vmatpush1.bf16.msra.mxu0 %v933
  %1288 = vmatprep.subr.bf16.mxu0 %v930
  %1289 = vmatpush1.bf16.msra.mxu0 %v929
  %1290 = vmatprep.subr.bf16.mxu0 %v926
  %1291 = vmatpush1.bf16.msra.mxu0 %v925
  %1292 = vmatprep.subr.bf16.mxu0 %v922
  %1293 = vmatpush1.bf16.msra.mxu0 %v921
  %1294 = vmatprep.subr.bf16.mxu0 %v918
  %1295 = vmatpush1.bf16.msra.mxu0 %v917
  %1296 = vmatprep.subr.bf16.mxu0 %v978
  %1297 = vmatpush2.bf16.msra.mxu0 %v977
  %1298 = vmatprep.subr.bf16.mxu0 %v974
  %1299 = vmatpush2.bf16.msra.mxu0 %v973
  %1300 = vmatprep.subr.bf16.mxu0 %v970
  %1301 = vmatpush2.bf16.msra.mxu0 %v969
  %1302 = vmatprep.subr.bf16.mxu0 %v966
  %1303 = vmatpush2.bf16.msra.mxu0 %v965
  %1304 = vmatprep.subr.bf16.mxu0 %v962
  %1305 = vmatpush2.bf16.msra.mxu0 %v961
  %1306 = vmatprep.subr.bf16.mxu0 %v958
  %1307 = vmatpush2.bf16.msra.mxu0 %v957
  %1308 = vmatprep.subr.bf16.mxu0 %v954
  %1309 = vmatpush2.bf16.msra.mxu0 %v953
  %1310 = vmatprep.subr.bf16.mxu0 %v950
  %1311 = vmatpush2.bf16.msra.mxu0 %v949
  %1312 = vmatprep.mubr.bf16.mxu0 %v268
  %1313 = vmatmul.mubr.bf16.gmra.mxu0 %v267
  %v1314 = vpop.f32.mrf.mxu0
  %v1315 = vadd.f32 %v1272, %v1314
  %v1316 = vpop.f32.mrf.mxu0
  %v1317 = vadd.f32 %v1274, %v1316
  %v1318 = vpop.f32.mrf.mxu0
  %v1319 = vadd.f32 %v1276, %v1318
  %v1320 = vpop.f32.mrf.mxu0
  %v1321 = vadd.f32 %v1278, %v1320
  %1322 = vdwg.mxu0
  %1323 = vmatprep.subr.bf16.mxu0 %v1010
  %1324 = vmatpush1.bf16.msra.mxu0 %v1009
  %1325 = vmatprep.subr.bf16.mxu0 %v1006
  %1326 = vmatpush1.bf16.msra.mxu0 %v1005
  %1327 = vmatprep.subr.bf16.mxu0 %v1002
  %1328 = vmatpush1.bf16.msra.mxu0 %v1001
  %1329 = vmatprep.subr.bf16.mxu0 %v998
  %1330 = vmatpush1.bf16.msra.mxu0 %v997
  %1331 = vmatprep.subr.bf16.mxu0 %v994
  %1332 = vmatpush1.bf16.msra.mxu0 %v993
  %1333 = vmatprep.subr.bf16.mxu0 %v990
  %1334 = vmatpush1.bf16.msra.mxu0 %v989
  %1335 = vmatprep.subr.bf16.mxu0 %v986
  %1336 = vmatpush1.bf16.msra.mxu0 %v985
  %1337 = vmatprep.subr.bf16.mxu0 %v982
  %1338 = vmatpush1.bf16.msra.mxu0 %v981
  %1339 = vmatprep.subr.bf16.mxu0 %v1042
  %1340 = vmatpush2.bf16.msra.mxu0 %v1041
  %1341 = vmatprep.subr.bf16.mxu0 %v1038
  %1342 = vmatpush2.bf16.msra.mxu0 %v1037
  %1343 = vmatprep.subr.bf16.mxu0 %v1034
  %1344 = vmatpush2.bf16.msra.mxu0 %v1033
  %1345 = vmatprep.subr.bf16.mxu0 %v1030
  %1346 = vmatpush2.bf16.msra.mxu0 %v1029
  %1347 = vmatprep.subr.bf16.mxu0 %v1026
  %1348 = vmatpush2.bf16.msra.mxu0 %v1025
  %1349 = vmatprep.subr.bf16.mxu0 %v1022
  %1350 = vmatpush2.bf16.msra.mxu0 %v1021
  %1351 = vmatprep.subr.bf16.mxu0 %v1018
  %1352 = vmatpush2.bf16.msra.mxu0 %v1017
  %1353 = vmatprep.subr.bf16.mxu0 %v1014
  %1354 = vmatpush2.bf16.msra.mxu0 %v1013
  %1355 = vmatprep.mubr.bf16.mxu0 %v270
  %1356 = vmatmul.mubr.bf16.gmra.mxu0 %v269
  %v1357 = vpop.f32.mrf.mxu0
  %v1358 = vadd.f32 %v1315, %v1357
  %v1359 = vpop.f32.mrf.mxu0
  %v1360 = vadd.f32 %v1317, %v1359
  %v1361 = vpop.f32.mrf.mxu0
  %v1362 = vadd.f32 %v1319, %v1361
  %v1363 = vpop.f32.mrf.mxu0
  %v1364 = vadd.f32 %v1321, %v1363
  %1365 = vdwg.mxu0
  %1366 = vmatprep.subr.bf16.mxu0 %v884
  %1367 = vmatpush1.bf16.msra.mxu0 %v883
  %1368 = vmatprep.subr.bf16.mxu0 %v880
  %1369 = vmatpush1.bf16.msra.mxu0 %v879
  %1370 = vmatprep.subr.bf16.mxu0 %v876
  %1371 = vmatpush1.bf16.msra.mxu0 %v875
  %1372 = vmatprep.subr.bf16.mxu0 %v872
  %1373 = vmatpush1.bf16.msra.mxu0 %v871
  %1374 = vmatprep.subr.bf16.mxu0 %v868
  %1375 = vmatpush1.bf16.msra.mxu0 %v867
  %1376 = vmatprep.subr.bf16.mxu0 %v864
  %1377 = vmatpush1.bf16.msra.mxu0 %v863
  %1378 = vmatprep.subr.bf16.mxu0 %v860
  %1379 = vmatpush1.bf16.msra.mxu0 %v859
  %1380 = vmatprep.subr.bf16.mxu0 %v856
  %1381 = vmatpush1.bf16.msra.mxu0 %v855
  %1382 = vmatprep.subr.bf16.mxu0 %v916
  %1383 = vmatpush2.bf16.msra.mxu0 %v915
  %1384 = vmatprep.subr.bf16.mxu0 %v912
  %1385 = vmatpush2.bf16.msra.mxu0 %v911
  %1386 = vmatprep.subr.bf16.mxu0 %v908
  %1387 = vmatpush2.bf16.msra.mxu0 %v907
  %1388 = vmatprep.subr.bf16.mxu0 %v904
  %1389 = vmatpush2.bf16.msra.mxu0 %v903
  %1390 = vmatprep.subr.bf16.mxu0 %v900
  %1391 = vmatpush2.bf16.msra.mxu0 %v899
  %1392 = vmatprep.subr.bf16.mxu0 %v896
  %1393 = vmatpush2.bf16.msra.mxu0 %v895
  %1394 = vmatprep.subr.bf16.mxu0 %v892
  %1395 = vmatpush2.bf16.msra.mxu0 %v891
  %1396 = vmatprep.subr.bf16.mxu0 %v888
  %1397 = vmatpush2.bf16.msra.mxu0 %v887
  %1398 = vmatprep.mubr.bf16.mxu0 %v266
  %1399 = vmatmul.mubr.bf16.gmra.mxu0 %v265
  %v1400 = vpop.f32.mrf.mxu0
  %v1401 = vadd.f32 %v238, %v1400
  %v1402 = vpop.f32.mrf.mxu0
  %v1403 = vadd.f32 %v242, %v1402
  %v1404 = vpop.f32.mrf.mxu0
  %v1405 = vadd.f32 %v238, %v1404
  %v1406 = vpop.f32.mrf.mxu0
  %v1407 = vadd.f32 %v242, %v1406
  %1408 = vdwg.mxu0
  %1409 = vmatprep.subr.bf16.mxu0 %v948
  %1410 = vmatpush1.bf16.msra.mxu0 %v947
  %1411 = vmatprep.subr.bf16.mxu0 %v944
  %1412 = vmatpush1.bf16.msra.mxu0 %v943
  %1413 = vmatprep.subr.bf16.mxu0 %v940
  %1414 = vmatpush1.bf16.msra.mxu0 %v939
  %1415 = vmatprep.subr.bf16.mxu0 %v936
  %1416 = vmatpush1.bf16.msra.mxu0 %v935
  %1417 = vmatprep.subr.bf16.mxu0 %v932
  %1418 = vmatpush1.bf16.msra.mxu0 %v931
  %1419 = vmatprep.subr.bf16.mxu0 %v928
  %1420 = vmatpush1.bf16.msra.mxu0 %v927
  %1421 = vmatprep.subr.bf16.mxu0 %v924
  %1422 = vmatpush1.bf16.msra.mxu0 %v923
  %1423 = vmatprep.subr.bf16.mxu0 %v920
  %1424 = vmatpush1.bf16.msra.mxu0 %v919
  %1425 = vmatprep.subr.bf16.mxu0 %v980
  %1426 = vmatpush2.bf16.msra.mxu0 %v979
  %1427 = vmatprep.subr.bf16.mxu0 %v976
  %1428 = vmatpush2.bf16.msra.mxu0 %v975
  %1429 = vmatprep.subr.bf16.mxu0 %v972
  %1430 = vmatpush2.bf16.msra.mxu0 %v971
  %1431 = vmatprep.subr.bf16.mxu0 %v968
  %1432 = vmatpush2.bf16.msra.mxu0 %v967
  %1433 = vmatprep.subr.bf16.mxu0 %v964
  %1434 = vmatpush2.bf16.msra.mxu0 %v963
  %1435 = vmatprep.subr.bf16.mxu0 %v960
  %1436 = vmatpush2.bf16.msra.mxu0 %v959
  %1437 = vmatprep.subr.bf16.mxu0 %v956
  %1438 = vmatpush2.bf16.msra.mxu0 %v955
  %1439 = vmatprep.subr.bf16.mxu0 %v952
  %1440 = vmatpush2.bf16.msra.mxu0 %v951
  %1441 = vmatprep.mubr.bf16.mxu0 %v268
  %1442 = vmatmul.mubr.bf16.gmra.mxu0 %v267
  %v1443 = vpop.f32.mrf.mxu0
  %v1444 = vadd.f32 %v1401, %v1443
  %v1445 = vpop.f32.mrf.mxu0
  %v1446 = vadd.f32 %v1403, %v1445
  %v1447 = vpop.f32.mrf.mxu0
  %v1448 = vadd.f32 %v1405, %v1447
  %v1449 = vpop.f32.mrf.mxu0
  %v1450 = vadd.f32 %v1407, %v1449
  %1451 = vdwg.mxu0
  %1452 = vmatprep.subr.bf16.mxu0 %v1012
  %1453 = vmatpush1.bf16.msra.mxu0 %v1011
  %1454 = vmatprep.subr.bf16.mxu0 %v1008
  %1455 = vmatpush1.bf16.msra.mxu0 %v1007
  %1456 = vmatprep.subr.bf16.mxu0 %v1004
  %1457 = vmatpush1.bf16.msra.mxu0 %v1003
  %1458 = vmatprep.subr.bf16.mxu0 %v1000
  %1459 = vmatpush1.bf16.msra.mxu0 %v999
  %1460 = vmatprep.subr.bf16.mxu0 %v996
  %1461 = vmatpush1.bf16.msra.mxu0 %v995
  %1462 = vmatprep.subr.bf16.mxu0 %v992
  %1463 = vmatpush1.bf16.msra.mxu0 %v991
  %1464 = vmatprep.subr.bf16.mxu0 %v988
  %1465 = vmatpush1.bf16.msra.mxu0 %v987
  %1466 = vmatprep.subr.bf16.mxu0 %v984
  %1467 = vmatpush1.bf16.msra.mxu0 %v983
  %1468 = vmatprep.subr.bf16.mxu0 %v1044
  %1469 = vmatpush2.bf16.msra.mxu0 %v1043
  %1470 = vmatprep.subr.bf16.mxu0 %v1040
  %1471 = vmatpush2.bf16.msra.mxu0 %v1039
  %1472 = vmatprep.subr.bf16.mxu0 %v1036
  %1473 = vmatpush2.bf16.msra.mxu0 %v1035
  %1474 = vmatprep.subr.bf16.mxu0 %v1032
  %1475 = vmatpush2.bf16.msra.mxu0 %v1031
  %1476 = vmatprep.subr.bf16.mxu0 %v1028
  %1477 = vmatpush2.bf16.msra.mxu0 %v1027
  %1478 = vmatprep.subr.bf16.mxu0 %v1024
  %1479 = vmatpush2.bf16.msra.mxu0 %v1023
  %1480 = vmatprep.subr.bf16.mxu0 %v1020
  %1481 = vmatpush2.bf16.msra.mxu0 %v1019
  %1482 = vmatprep.subr.bf16.mxu0 %v1016
  %1483 = vmatpush2.bf16.msra.mxu0 %v1015
  %1484 = vmatprep.mubr.bf16.mxu0 %v270
  %1485 = vmatmul.mubr.bf16.gmra.mxu0 %v269
  %v1486 = vpop.f32.mrf.mxu0
  %v1487 = vadd.f32 %v1444, %v1486
  %v1488 = vpop.f32.mrf.mxu0
  %v1489 = vadd.f32 %v1446, %v1488
  %v1490 = vpop.f32.mrf.mxu0
  %v1491 = vadd.f32 %v1448, %v1490
  %v1492 = vpop.f32.mrf.mxu0
  %v1493 = vadd.f32 %v1450, %v1492
  %1494 = vdwg.mxu0
  %v1495 = vmax.f32 %v1358, 0.0
  %v1496 = vmax.f32 %v1360, 0.0
  %v1497 = vmax.f32 %v1487, 0.0
  %v1498 = vmax.f32 %v1489, 0.0
  %v1499 = vmax.f32 %v1362, 0.0
  %v1500 = vmax.f32 %v1364, 0.0
  %v1501 = vmax.f32 %v1491, 0.0
  %v1502 = vmax.f32 %v1493, 0.0
  %v1503 = vpack.c.bf16 %v1499, %v1495
  %v1504 = vpack.c.bf16 %v1500, %v1496
  %v1505 = vpack.c.bf16 %v1501, %v1497
  %v1506 = vpack.c.bf16 %v1502, %v1498
  %v1507 = vld [vmem:[%s3] sm:$0xff]
  %v1508 = vld [vmem:[%s3 + $0x8] sm:$0xff]
  %v1509 = vld [vmem:[%s3 + $0x10] sm:$0xff]
  %v1510 = vld [vmem:[%s3 + $0x18] sm:$0xff]
  %v1511 = vld [vmem:[%s3 + $0x20] sm:$0xff]
  %v1512 = vld [vmem:[%s3 + $0x28] sm:$0xff]
  %v1513 = vld [vmem:[%s3 + $0x30] sm:$0xff]
  %v1514 = vld [vmem:[%s3 + $0x38] sm:$0xff]
  %v1515 = vld [vmem:[%s3 + $0x40] sm:$0xff]
  %v1516 = vld [vmem:[%s3 + $0x48] sm:$0xff]
  %v1517 = vld [vmem:[%s3 + $0x50] sm:$0xff]
  %v1518 = vld [vmem:[%s3 + $0x58] sm:$0xff]
  %v1519 = vld [vmem:[%s3 + $0x60] sm:$0xff]
  %v1520 = vld [vmem:[%s3 + $0x68] sm:$0xff]
  %v1521 = vld [vmem:[%s3 + $0x70] sm:$0xff]
  %v1522 = vld [vmem:[%s3 + $0x78] sm:$0xff]
  %v1523 = vld [vmem:[%s3 + $0x80] sm:$0xff]
  %v1524 = vld [vmem:[%s3 + $0x88] sm:$0xff]
  %v1525 = vld [vmem:[%s3 + $0x90] sm:$0xff]
  %v1526 = vld [vmem:[%s3 + $0x98] sm:$0xff]
  %v1527 = vld [vmem:[%s3 + $0xa0] sm:$0xff]
  %v1528 = vld [vmem:[%s3 + $0xa8] sm:$0xff]
  %v1529 = vld [vmem:[%s3 + $0xb0] sm:$0xff]
  %v1530 = vld [vmem:[%s3 + $0xb8] sm:$0xff]
  %v1531 = vld [vmem:[%s3 + $0xc0] sm:$0xff]
  %v1532 = vld [vmem:[%s3 + $0xc8] sm:$0xff]
  %v1533 = vld [vmem:[%s3 + $0xd0] sm:$0xff]
  %v1534 = vld [vmem:[%s3 + $0xd8] sm:$0xff]
  %v1535 = vld [vmem:[%s3 + $0xe0] sm:$0xff]
  %v1536 = vld [vmem:[%s3 + $0xe8] sm:$0xff]
  %v1537 = vld [vmem:[%s3 + $0xf0] sm:$0xff]
  %v1538 = vld [vmem:[%s3 + $0xf8] sm:$0xff]
  %v1539 = vld [vmem:[%s3 + $0x100] sm:$0xff]
  %v1540 = vld [vmem:[%s3 + $0x108] sm:$0xff]
  %v1541 = vld [vmem:[%s3 + $0x110] sm:$0xff]
  %v1542 = vld [vmem:[%s3 + $0x118] sm:$0xff]
  %v1543 = vld [vmem:[%s3 + $0x120] sm:$0xff]
  %v1544 = vld [vmem:[%s3 + $0x128] sm:$0xff]
  %v1545 = vld [vmem:[%s3 + $0x130] sm:$0xff]
  %v1546 = vld [vmem:[%s3 + $0x138] sm:$0xff]
  %v1547 = vld [vmem:[%s3 + $0x140] sm:$0xff]
  %v1548 = vld [vmem:[%s3 + $0x148] sm:$0xff]
  %v1549 = vld [vmem:[%s3 + $0x150] sm:$0xff]
  %v1550 = vld [vmem:[%s3 + $0x158] sm:$0xff]
  %v1551 = vld [vmem:[%s3 + $0x160] sm:$0xff]
  %v1552 = vld [vmem:[%s3 + $0x168] sm:$0xff]
  %v1553 = vld [vmem:[%s3 + $0x170] sm:$0xff]
  %v1554 = vld [vmem:[%s3 + $0x178] sm:$0xff]
  %v1555 = vld [vmem:[%s3 + $0x180] sm:$0xff]
  %v1556 = vld [vmem:[%s3 + $0x188] sm:$0xff]
  %v1557 = vld [vmem:[%s3 + $0x190] sm:$0xff]
  %v1558 = vld [vmem:[%s3 + $0x198] sm:$0xff]
  %v1559 = vld [vmem:[%s3 + $0x1a0] sm:$0xff]
  %v1560 = vld [vmem:[%s3 + $0x1a8] sm:$0xff]
  %v1561 = vld [vmem:[%s3 + $0x1b0] sm:$0xff]
  %v1562 = vld [vmem:[%s3 + $0x1b8] sm:$0xff]
  %v1563 = vld [vmem:[%s3 + $0x1c0] sm:$0xff]
  %v1564 = vld [vmem:[%s3 + $0x1c8] sm:$0xff]
  %v1565 = vld [vmem:[%s3 + $0x1d0] sm:$0xff]
  %v1566 = vld [vmem:[%s3 + $0x1d8] sm:$0xff]
  %v1567 = vld [vmem:[%s3 + $0x1e0] sm:$0xff]
  %v1568 = vld [vmem:[%s3 + $0x1e8] sm:$0xff]
  %v1569 = vld [vmem:[%s3 + $0x1f0] sm:$0xff]
  %v1570 = vld [vmem:[%s3 + $0x1f8] sm:$0xff]
  %v1571 = vld [vmem:[%s3 + $0x200] sm:$0xff]
  %v1572 = vld [vmem:[%s3 + $0x208] sm:$0xff]
  %v1573 = vld [vmem:[%s3 + $0x210] sm:$0xff]
  %v1574 = vld [vmem:[%s3 + $0x218] sm:$0xff]
  %v1575 = vld [vmem:[%s3 + $0x220] sm:$0xff]
  %v1576 = vld [vmem:[%s3 + $0x228] sm:$0xff]
  %v1577 = vld [vmem:[%s3 + $0x230] sm:$0xff]
  %v1578 = vld [vmem:[%s3 + $0x238] sm:$0xff]
  %v1579 = vld [vmem:[%s3 + $0x240] sm:$0xff]
  %v1580 = vld [vmem:[%s3 + $0x248] sm:$0xff]
  %v1581 = vld [vmem:[%s3 + $0x250] sm:$0xff]
  %v1582 = vld [vmem:[%s3 + $0x258] sm:$0xff]
  %v1583 = vld [vmem:[%s3 + $0x260] sm:$0xff]
  %v1584 = vld [vmem:[%s3 + $0x268] sm:$0xff]
  %v1585 = vld [vmem:[%s3 + $0x270] sm:$0xff]
  %v1586 = vld [vmem:[%s3 + $0x278] sm:$0xff]
  %v1587 = vld [vmem:[%s3 + $0x280] sm:$0xff]
  %v1588 = vld [vmem:[%s3 + $0x288] sm:$0xff]
  %v1589 = vld [vmem:[%s3 + $0x290] sm:$0xff]
  %v1590 = vld [vmem:[%s3 + $0x298] sm:$0xff]
  %v1591 = vld [vmem:[%s3 + $0x2a0] sm:$0xff]
  %v1592 = vld [vmem:[%s3 + $0x2a8] sm:$0xff]
  %v1593 = vld [vmem:[%s3 + $0x2b0] sm:$0xff]
  %v1594 = vld [vmem:[%s3 + $0x2b8] sm:$0xff]
  %v1595 = vld [vmem:[%s3 + $0x2c0] sm:$0xff]
  %v1596 = vld [vmem:[%s3 + $0x2c8] sm:$0xff]
  %v1597 = vld [vmem:[%s3 + $0x2d0] sm:$0xff]
  %v1598 = vld [vmem:[%s3 + $0x2d8] sm:$0xff]
  %v1599 = vld [vmem:[%s3 + $0x2e0] sm:$0xff]
  %v1600 = vld [vmem:[%s3 + $0x2e8] sm:$0xff]
  %v1601 = vld [vmem:[%s3 + $0x2f0] sm:$0xff]
  %v1602 = vld [vmem:[%s3 + $0x2f8] sm:$0xff]
  %v1603 = vld [vmem:[%s3 + $0x300] sm:$0xff]
  %v1604 = vld [vmem:[%s3 + $0x308] sm:$0xff]
  %v1605 = vld [vmem:[%s3 + $0x310] sm:$0xff]
  %v1606 = vld [vmem:[%s3 + $0x318] sm:$0xff]
  %v1607 = vld [vmem:[%s3 + $0x320] sm:$0xff]
  %v1608 = vld [vmem:[%s3 + $0x328] sm:$0xff]
  %v1609 = vld [vmem:[%s3 + $0x330] sm:$0xff]
  %v1610 = vld [vmem:[%s3 + $0x338] sm:$0xff]
  %v1611 = vld [vmem:[%s3 + $0x340] sm:$0xff]
  %v1612 = vld [vmem:[%s3 + $0x348] sm:$0xff]
  %v1613 = vld [vmem:[%s3 + $0x350] sm:$0xff]
  %v1614 = vld [vmem:[%s3 + $0x358] sm:$0xff]
  %v1615 = vld [vmem:[%s3 + $0x360] sm:$0xff]
  %v1616 = vld [vmem:[%s3 + $0x368] sm:$0xff]
  %v1617 = vld [vmem:[%s3 + $0x370] sm:$0xff]
  %v1618 = vld [vmem:[%s3 + $0x378] sm:$0xff]
  %v1619 = vld [vmem:[%s3 + $0x380] sm:$0xff]
  %v1620 = vld [vmem:[%s3 + $0x388] sm:$0xff]
  %v1621 = vld [vmem:[%s3 + $0x390] sm:$0xff]
  %v1622 = vld [vmem:[%s3 + $0x398] sm:$0xff]
  %v1623 = vld [vmem:[%s3 + $0x3a0] sm:$0xff]
  %v1624 = vld [vmem:[%s3 + $0x3a8] sm:$0xff]
  %v1625 = vld [vmem:[%s3 + $0x3b0] sm:$0xff]
  %v1626 = vld [vmem:[%s3 + $0x3b8] sm:$0xff]
  %v1627 = vld [vmem:[%s3 + $0x3c0] sm:$0xff]
  %v1628 = vld [vmem:[%s3 + $0x3c8] sm:$0xff]
  %v1629 = vld [vmem:[%s3 + $0x3d0] sm:$0xff]
  %v1630 = vld [vmem:[%s3 + $0x3d8] sm:$0xff]
  %v1631 = vld [vmem:[%s3 + $0x3e0] sm:$0xff]
  %v1632 = vld [vmem:[%s3 + $0x3e8] sm:$0xff]
  %v1633 = vld [vmem:[%s3 + $0x3f0] sm:$0xff]
  %v1634 = vld [vmem:[%s3 + $0x3f8] sm:$0xff]
  %v1635 = vld [vmem:[%s4] sm:$0xf]
  %v1637 = vlaneseq
  %v1638 = vshrl.u32 %v1637, 7
  %v1639 = vsub.s32 0, %v1638
  %v1640 = vrot.slane %v1635, %v1639
  %v1641 = vlaneseq
  %v1642 = vshrl.u32 %v1641, 7
  %v1643 = vsub.s32 1, %v1642
  %v1644 = vrot.slane %v1635, %v1643
  %v1645 = vlaneseq
  %v1646 = vshrl.u32 %v1645, 7
  %v1647 = vsub.s32 2, %v1646
  %v1648 = vrot.slane %v1635, %v1647
  %v1649 = vlaneseq
  %v1650 = vshrl.u32 %v1649, 7
  %v1651 = vsub.s32 3, %v1650
  %v1652 = vrot.slane %v1635, %v1651
  %v1785 = vunpack.c.l.b16 %v1507
  %v1786 = vunpack.c.h.b16 %v1507
  %v1787 = vunpack.c.l.b16 %v1508
  %v1788 = vunpack.c.h.b16 %v1508
  %v1789 = vunpack.c.l.b16 %v1509
  %v1790 = vunpack.c.h.b16 %v1509
  %v1791 = vunpack.c.l.b16 %v1510
  %v1792 = vunpack.c.h.b16 %v1510
  %v1793 = vunpack.c.l.b16 %v1511
  %v1794 = vunpack.c.h.b16 %v1511
  %v1795 = vunpack.c.l.b16 %v1512
  %v1796 = vunpack.c.h.b16 %v1512
  %v1797 = vunpack.c.l.b16 %v1513
  %v1798 = vunpack.c.h.b16 %v1513
  %v1799 = vunpack.c.l.b16 %v1514
  %v1800 = vunpack.c.h.b16 %v1514
  %v1801 = vunpack.c.l.b16 %v1515
  %v1802 = vunpack.c.h.b16 %v1515
  %v1803 = vunpack.c.l.b16 %v1516
  %v1804 = vunpack.c.h.b16 %v1516
  %v1805 = vunpack.c.l.b16 %v1517
  %v1806 = vunpack.c.h.b16 %v1517
  %v1807 = vunpack.c.l.b16 %v1518
  %v1808 = vunpack.c.h.b16 %v1518
  %v1809 = vunpack.c.l.b16 %v1519
  %v1810 = vunpack.c.h.b16 %v1519
  %v1811 = vunpack.c.l.b16 %v1520
  %v1812 = vunpack.c.h.b16 %v1520
  %v1813 = vunpack.c.l.b16 %v1521
  %v1814 = vunpack.c.h.b16 %v1521
  %v1815 = vunpack.c.l.b16 %v1522
  %v1816 = vunpack.c.h.b16 %v1522
  %v1817 = vunpack.c.l.b16 %v1523
  %v1818 = vunpack.c.h.b16 %v1523
  %v1819 = vunpack.c.l.b16 %v1524
  %v1820 = vunpack.c.h.b16 %v1524
  %v1821 = vunpack.c.l.b16 %v1525
  %v1822 = vunpack.c.h.b16 %v1525
  %v1823 = vunpack.c.l.b16 %v1526
  %v1824 = vunpack.c.h.b16 %v1526
  %v1825 = vunpack.c.l.b16 %v1527
  %v1826 = vunpack.c.h.b16 %v1527
  %v1827 = vunpack.c.l.b16 %v1528
  %v1828 = vunpack.c.h.b16 %v1528
  %v1829 = vunpack.c.l.b16 %v1529
  %v1830 = vunpack.c.h.b16 %v1529
  %v1831 = vunpack.c.l.b16 %v1530
  %v1832 = vunpack.c.h.b16 %v1530
  %v1833 = vunpack.c.l.b16 %v1531
  %v1834 = vunpack.c.h.b16 %v1531
  %v1835 = vunpack.c.l.b16 %v1532
  %v1836 = vunpack.c.h.b16 %v1532
  %v1837 = vunpack.c.l.b16 %v1533
  %v1838 = vunpack.c.h.b16 %v1533
  %v1839 = vunpack.c.l.b16 %v1534
  %v1840 = vunpack.c.h.b16 %v1534
  %v1841 = vunpack.c.l.b16 %v1535
  %v1842 = vunpack.c.h.b16 %v1535
  %v1843 = vunpack.c.l.b16 %v1536
  %v1844 = vunpack.c.h.b16 %v1536
  %v1845 = vunpack.c.l.b16 %v1537
  %v1846 = vunpack.c.h.b16 %v1537
  %v1847 = vunpack.c.l.b16 %v1538
  %v1848 = vunpack.c.h.b16 %v1538
  %v1849 = vunpack.c.l.b16 %v1539
  %v1850 = vunpack.c.h.b16 %v1539
  %v1851 = vunpack.c.l.b16 %v1540
  %v1852 = vunpack.c.h.b16 %v1540
  %v1853 = vunpack.c.l.b16 %v1541
  %v1854 = vunpack.c.h.b16 %v1541
  %v1855 = vunpack.c.l.b16 %v1542
  %v1856 = vunpack.c.h.b16 %v1542
  %v1857 = vunpack.c.l.b16 %v1543
  %v1858 = vunpack.c.h.b16 %v1543
  %v1859 = vunpack.c.l.b16 %v1544
  %v1860 = vunpack.c.h.b16 %v1544
  %v1861 = vunpack.c.l.b16 %v1545
  %v1862 = vunpack.c.h.b16 %v1545
  %v1863 = vunpack.c.l.b16 %v1546
  %v1864 = vunpack.c.h.b16 %v1546
  %v1865 = vunpack.c.l.b16 %v1547
  %v1866 = vunpack.c.h.b16 %v1547
  %v1867 = vunpack.c.l.b16 %v1548
  %v1868 = vunpack.c.h.b16 %v1548
  %v1869 = vunpack.c.l.b16 %v1549
  %v1870 = vunpack.c.h.b16 %v1549
  %v1871 = vunpack.c.l.b16 %v1550
  %v1872 = vunpack.c.h.b16 %v1550
  %v1873 = vunpack.c.l.b16 %v1551
  %v1874 = vunpack.c.h.b16 %v1551
  %v1875 = vunpack.c.l.b16 %v1552
  %v1876 = vunpack.c.h.b16 %v1552
  %v1877 = vunpack.c.l.b16 %v1553
  %v1878 = vunpack.c.h.b16 %v1553
  %v1879 = vunpack.c.l.b16 %v1554
  %v1880 = vunpack.c.h.b16 %v1554
  %v1881 = vunpack.c.l.b16 %v1555
  %v1882 = vunpack.c.h.b16 %v1555
  %v1883 = vunpack.c.l.b16 %v1556
  %v1884 = vunpack.c.h.b16 %v1556
  %v1885 = vunpack.c.l.b16 %v1557
  %v1886 = vunpack.c.h.b16 %v1557
  %v1887 = vunpack.c.l.b16 %v1558
  %v1888 = vunpack.c.h.b16 %v1558
  %v1889 = vunpack.c.l.b16 %v1559
  %v1890 = vunpack.c.h.b16 %v1559
  %v1891 = vunpack.c.l.b16 %v1560
  %v1892 = vunpack.c.h.b16 %v1560
  %v1893 = vunpack.c.l.b16 %v1561
  %v1894 = vunpack.c.h.b16 %v1561
  %v1895 = vunpack.c.l.b16 %v1562
  %v1896 = vunpack.c.h.b16 %v1562
  %v1897 = vunpack.c.l.b16 %v1563
  %v1898 = vunpack.c.h.b16 %v1563
  %v1899 = vunpack.c.l.b16 %v1564
  %v1900 = vunpack.c.h.b16 %v1564
  %v1901 = vunpack.c.l.b16 %v1565
  %v1902 = vunpack.c.h.b16 %v1565
  %v1903 = vunpack.c.l.b16 %v1566
  %v1904 = vunpack.c.h.b16 %v1566
  %v1905 = vunpack.c.l.b16 %v1567
  %v1906 = vunpack.c.h.b16 %v1567
  %v1907 = vunpack.c.l.b16 %v1568
  %v1908 = vunpack.c.h.b16 %v1568
  %v1909 = vunpack.c.l.b16 %v1569
  %v1910 = vunpack.c.h.b16 %v1569
  %v1911 = vunpack.c.l.b16 %v1570
  %v1912 = vunpack.c.h.b16 %v1570
  %v1913 = vunpack.c.l.b16 %v1571
  %v1914 = vunpack.c.h.b16 %v1571
  %v1915 = vunpack.c.l.b16 %v1572
  %v1916 = vunpack.c.h.b16 %v1572
  %v1917 = vunpack.c.l.b16 %v1573
  %v1918 = vunpack.c.h.b16 %v1573
  %v1919 = vunpack.c.l.b16 %v1574
  %v1920 = vunpack.c.h.b16 %v1574
  %v1921 = vunpack.c.l.b16 %v1575
  %v1922 = vunpack.c.h.b16 %v1575
  %v1923 = vunpack.c.l.b16 %v1576
  %v1924 = vunpack.c.h.b16 %v1576
  %v1925 = vunpack.c.l.b16 %v1577
  %v1926 = vunpack.c.h.b16 %v1577
  %v1927 = vunpack.c.l.b16 %v1578
  %v1928 = vunpack.c.h.b16 %v1578
  %v1929 = vunpack.c.l.b16 %v1579
  %v1930 = vunpack.c.h.b16 %v1579
  %v1931 = vunpack.c.l.b16 %v1580
  %v1932 = vunpack.c.h.b16 %v1580
  %v1933 = vunpack.c.l.b16 %v1581
  %v1934 = vunpack.c.h.b16 %v1581
  %v1935 = vunpack.c.l.b16 %v1582
  %v1936 = vunpack.c.h.b16 %v1582
  %v1937 = vunpack.c.l.b16 %v1583
  %v1938 = vunpack.c.h.b16 %v1583
  %v1939 = vunpack.c.l.b16 %v1584
  %v1940 = vunpack.c.h.b16 %v1584
  %v1941 = vunpack.c.l.b16 %v1585
  %v1942 = vunpack.c.h.b16 %v1585
  %v1943 = vunpack.c.l.b16 %v1586
  %v1944 = vunpack.c.h.b16 %v1586
  %v1945 = vunpack.c.l.b16 %v1587
  %v1946 = vunpack.c.h.b16 %v1587
  %v1947 = vunpack.c.l.b16 %v1588
  %v1948 = vunpack.c.h.b16 %v1588
  %v1949 = vunpack.c.l.b16 %v1589
  %v1950 = vunpack.c.h.b16 %v1589
  %v1951 = vunpack.c.l.b16 %v1590
  %v1952 = vunpack.c.h.b16 %v1590
  %v1953 = vunpack.c.l.b16 %v1591
  %v1954 = vunpack.c.h.b16 %v1591
  %v1955 = vunpack.c.l.b16 %v1592
  %v1956 = vunpack.c.h.b16 %v1592
  %v1957 = vunpack.c.l.b16 %v1593
  %v1958 = vunpack.c.h.b16 %v1593
  %v1959 = vunpack.c.l.b16 %v1594
  %v1960 = vunpack.c.h.b16 %v1594
  %v1961 = vunpack.c.l.b16 %v1595
  %v1962 = vunpack.c.h.b16 %v1595
  %v1963 = vunpack.c.l.b16 %v1596
  %v1964 = vunpack.c.h.b16 %v1596
  %v1965 = vunpack.c.l.b16 %v1597
  %v1966 = vunpack.c.h.b16 %v1597
  %v1967 = vunpack.c.l.b16 %v1598
  %v1968 = vunpack.c.h.b16 %v1598
  %v1969 = vunpack.c.l.b16 %v1599
  %v1970 = vunpack.c.h.b16 %v1599
  %v1971 = vunpack.c.l.b16 %v1600
  %v1972 = vunpack.c.h.b16 %v1600
  %v1973 = vunpack.c.l.b16 %v1601
  %v1974 = vunpack.c.h.b16 %v1601
  %v1975 = vunpack.c.l.b16 %v1602
  %v1976 = vunpack.c.h.b16 %v1602
  %v1977 = vunpack.c.l.b16 %v1603
  %v1978 = vunpack.c.h.b16 %v1603
  %v1979 = vunpack.c.l.b16 %v1604
  %v1980 = vunpack.c.h.b16 %v1604
  %v1981 = vunpack.c.l.b16 %v1605
  %v1982 = vunpack.c.h.b16 %v1605
  %v1983 = vunpack.c.l.b16 %v1606
  %v1984 = vunpack.c.h.b16 %v1606
  %v1985 = vunpack.c.l.b16 %v1607
  %v1986 = vunpack.c.h.b16 %v1607
  %v1987 = vunpack.c.l.b16 %v1608
  %v1988 = vunpack.c.h.b16 %v1608
  %v1989 = vunpack.c.l.b16 %v1609
  %v1990 = vunpack.c.h.b16 %v1609
  %v1991 = vunpack.c.l.b16 %v1610
  %v1992 = vunpack.c.h.b16 %v1610
  %v1993 = vunpack.c.l.b16 %v1611
  %v1994 = vunpack.c.h.b16 %v1611
  %v1995 = vunpack.c.l.b16 %v1612
  %v1996 = vunpack.c.h.b16 %v1612
  %v1997 = vunpack.c.l.b16 %v1613
  %v1998 = vunpack.c.h.b16 %v1613
  %v1999 = vunpack.c.l.b16 %v1614
  %v2000 = vunpack.c.h.b16 %v1614
  %v2001 = vunpack.c.l.b16 %v1615
  %v2002 = vunpack.c.h.b16 %v1615
  %v2003 = vunpack.c.l.b16 %v1616
  %v2004 = vunpack.c.h.b16 %v1616
  %v2005 = vunpack.c.l.b16 %v1617
  %v2006 = vunpack.c.h.b16 %v1617
  %v2007 = vunpack.c.l.b16 %v1618
  %v2008 = vunpack.c.h.b16 %v1618
  %v2009 = vunpack.c.l.b16 %v1619
  %v2010 = vunpack.c.h.b16 %v1619
  %v2011 = vunpack.c.l.b16 %v1620
  %v2012 = vunpack.c.h.b16 %v1620
  %v2013 = vunpack.c.l.b16 %v1621
  %v2014 = vunpack.c.h.b16 %v1621
  %v2015 = vunpack.c.l.b16 %v1622
  %v2016 = vunpack.c.h.b16 %v1622
  %v2017 = vunpack.c.l.b16 %v1623
  %v2018 = vunpack.c.h.b16 %v1623
  %v2019 = vunpack.c.l.b16 %v1624
  %v2020 = vunpack.c.h.b16 %v1624
  %v2021 = vunpack.c.l.b16 %v1625
  %v2022 = vunpack.c.h.b16 %v1625
  %v2023 = vunpack.c.l.b16 %v1626
  %v2024 = vunpack.c.h.b16 %v1626
  %v2025 = vunpack.c.l.b16 %v1627
  %v2026 = vunpack.c.h.b16 %v1627
  %v2027 = vunpack.c.l.b16 %v1628
  %v2028 = vunpack.c.h.b16 %v1628
  %v2029 = vunpack.c.l.b16 %v1629
  %v2030 = vunpack.c.h.b16 %v1629
  %v2031 = vunpack.c.l.b16 %v1630
  %v2032 = vunpack.c.h.b16 %v1630
  %v2033 = vunpack.c.l.b16 %v1631
  %v2034 = vunpack.c.h.b16 %v1631
  %v2035 = vunpack.c.l.b16 %v1632
  %v2036 = vunpack.c.h.b16 %v1632
  %v2037 = vunpack.c.l.b16 %v1633
  %v2038 = vunpack.c.h.b16 %v1633
  %v2039 = vunpack.c.l.b16 %v1634
  %v2040 = vunpack.c.h.b16 %v1634
  %v2041 = vpack.c.b16 %v1789, %v1785
  %v2042 = vpack.c.b16 %v1790, %v1786
  %v2043 = vpack.c.b16 %v1791, %v1787
  %v2044 = vpack.c.b16 %v1792, %v1788
  %v2045 = vpack.c.b16 %v1797, %v1793
  %v2046 = vpack.c.b16 %v1798, %v1794
  %v2047 = vpack.c.b16 %v1799, %v1795
  %v2048 = vpack.c.b16 %v1800, %v1796
  %v2049 = vpack.c.b16 %v1805, %v1801
  %v2050 = vpack.c.b16 %v1806, %v1802
  %v2051 = vpack.c.b16 %v1807, %v1803
  %v2052 = vpack.c.b16 %v1808, %v1804
  %v2053 = vpack.c.b16 %v1813, %v1809
  %v2054 = vpack.c.b16 %v1814, %v1810
  %v2055 = vpack.c.b16 %v1815, %v1811
  %v2056 = vpack.c.b16 %v1816, %v1812
  %v2057 = vpack.c.b16 %v1821, %v1817
  %v2058 = vpack.c.b16 %v1822, %v1818
  %v2059 = vpack.c.b16 %v1823, %v1819
  %v2060 = vpack.c.b16 %v1824, %v1820
  %v2061 = vpack.c.b16 %v1829, %v1825
  %v2062 = vpack.c.b16 %v1830, %v1826
  %v2063 = vpack.c.b16 %v1831, %v1827
  %v2064 = vpack.c.b16 %v1832, %v1828
  %v2065 = vpack.c.b16 %v1837, %v1833
  %v2066 = vpack.c.b16 %v1838, %v1834
  %v2067 = vpack.c.b16 %v1839, %v1835
  %v2068 = vpack.c.b16 %v1840, %v1836
  %v2069 = vpack.c.b16 %v1845, %v1841
  %v2070 = vpack.c.b16 %v1846, %v1842
  %v2071 = vpack.c.b16 %v1847, %v1843
  %v2072 = vpack.c.b16 %v1848, %v1844
  %v2073 = vpack.c.b16 %v1853, %v1849
  %v2074 = vpack.c.b16 %v1854, %v1850
  %v2075 = vpack.c.b16 %v1855, %v1851
  %v2076 = vpack.c.b16 %v1856, %v1852
  %v2077 = vpack.c.b16 %v1861, %v1857
  %v2078 = vpack.c.b16 %v1862, %v1858
  %v2079 = vpack.c.b16 %v1863, %v1859
  %v2080 = vpack.c.b16 %v1864, %v1860
  %v2081 = vpack.c.b16 %v1869, %v1865
  %v2082 = vpack.c.b16 %v1870, %v1866
  %v2083 = vpack.c.b16 %v1871, %v1867
  %v2084 = vpack.c.b16 %v1872, %v1868
  %v2085 = vpack.c.b16 %v1877, %v1873
  %v2086 = vpack.c.b16 %v1878, %v1874
  %v2087 = vpack.c.b16 %v1879, %v1875
  %v2088 = vpack.c.b16 %v1880, %v1876
  %v2089 = vpack.c.b16 %v1885, %v1881
  %v2090 = vpack.c.b16 %v1886, %v1882
  %v2091 = vpack.c.b16 %v1887, %v1883
  %v2092 = vpack.c.b16 %v1888, %v1884
  %v2093 = vpack.c.b16 %v1893, %v1889
  %v2094 = vpack.c.b16 %v1894, %v1890
  %v2095 = vpack.c.b16 %v1895, %v1891
  %v2096 = vpack.c.b16 %v1896, %v1892
  %v2097 = vpack.c.b16 %v1901, %v1897
  %v2098 = vpack.c.b16 %v1902, %v1898
  %v2099 = vpack.c.b16 %v1903, %v1899
  %v2100 = vpack.c.b16 %v1904, %v1900
  %v2101 = vpack.c.b16 %v1909, %v1905
  %v2102 = vpack.c.b16 %v1910, %v1906
  %v2103 = vpack.c.b16 %v1911, %v1907
  %v2104 = vpack.c.b16 %v1912, %v1908
  %v2105 = vpack.c.b16 %v1917, %v1913
  %v2106 = vpack.c.b16 %v1918, %v1914
  %v2107 = vpack.c.b16 %v1919, %v1915
  %v2108 = vpack.c.b16 %v1920, %v1916
  %v2109 = vpack.c.b16 %v1925, %v1921
  %v2110 = vpack.c.b16 %v1926, %v1922
  %v2111 = vpack.c.b16 %v1927, %v1923
  %v2112 = vpack.c.b16 %v1928, %v1924
  %v2113 = vpack.c.b16 %v1933, %v1929
  %v2114 = vpack.c.b16 %v1934, %v1930
  %v2115 = vpack.c.b16 %v1935, %v1931
  %v2116 = vpack.c.b16 %v1936, %v1932
  %v2117 = vpack.c.b16 %v1941, %v1937
  %v2118 = vpack.c.b16 %v1942, %v1938
  %v2119 = vpack.c.b16 %v1943, %v1939
  %v2120 = vpack.c.b16 %v1944, %v1940
  %v2121 = vpack.c.b16 %v1949, %v1945
  %v2122 = vpack.c.b16 %v1950, %v1946
  %v2123 = vpack.c.b16 %v1951, %v1947
  %v2124 = vpack.c.b16 %v1952, %v1948
  %v2125 = vpack.c.b16 %v1957, %v1953
  %v2126 = vpack.c.b16 %v1958, %v1954
  %v2127 = vpack.c.b16 %v1959, %v1955
  %v2128 = vpack.c.b16 %v1960, %v1956
  %v2129 = vpack.c.b16 %v1965, %v1961
  %v2130 = vpack.c.b16 %v1966, %v1962
  %v2131 = vpack.c.b16 %v1967, %v1963
  %v2132 = vpack.c.b16 %v1968, %v1964
  %v2133 = vpack.c.b16 %v1973, %v1969
  %v2134 = vpack.c.b16 %v1974, %v1970
  %v2135 = vpack.c.b16 %v1975, %v1971
  %v2136 = vpack.c.b16 %v1976, %v1972
  %v2137 = vpack.c.b16 %v1981, %v1977
  %v2138 = vpack.c.b16 %v1982, %v1978
  %v2139 = vpack.c.b16 %v1983, %v1979
  %v2140 = vpack.c.b16 %v1984, %v1980
  %v2141 = vpack.c.b16 %v1989, %v1985
  %v2142 = vpack.c.b16 %v1990, %v1986
  %v2143 = vpack.c.b16 %v1991, %v1987
  %v2144 = vpack.c.b16 %v1992, %v1988
  %v2145 = vpack.c.b16 %v1997, %v1993
  %v2146 = vpack.c.b16 %v1998, %v1994
  %v2147 = vpack.c.b16 %v1999, %v1995
  %v2148 = vpack.c.b16 %v2000, %v1996
  %v2149 = vpack.c.b16 %v2005, %v2001
  %v2150 = vpack.c.b16 %v2006, %v2002
  %v2151 = vpack.c.b16 %v2007, %v2003
  %v2152 = vpack.c.b16 %v2008, %v2004
  %v2153 = vpack.c.b16 %v2013, %v2009
  %v2154 = vpack.c.b16 %v2014, %v2010
  %v2155 = vpack.c.b16 %v2015, %v2011
  %v2156 = vpack.c.b16 %v2016, %v2012
  %v2157 = vpack.c.b16 %v2021, %v2017
  %v2158 = vpack.c.b16 %v2022, %v2018
  %v2159 = vpack.c.b16 %v2023, %v2019
  %v2160 = vpack.c.b16 %v2024, %v2020
  %v2161 = vpack.c.b16 %v2029, %v2025
  %v2162 = vpack.c.b16 %v2030, %v2026
  %v2163 = vpack.c.b16 %v2031, %v2027
  %v2164 = vpack.c.b16 %v2032, %v2028
  %v2165 = vpack.c.b16 %v2037, %v2033
  %v2166 = vpack.c.b16 %v2038, %v2034
  %v2167 = vpack.c.b16 %v2039, %v2035
  %v2168 = vpack.c.b16 %v2040, %v2036
  %2297 = vmatprep.subr.bf16.mxu0 %v2070
  %2298 = vmatpush1.bf16.msra.mxu0 %v2069
  %2299 = vmatprep.subr.bf16.mxu0 %v2066
  %2300 = vmatpush1.bf16.msra.mxu0 %v2065
  %2301 = vmatprep.subr.bf16.mxu0 %v2062
  %2302 = vmatpush1.bf16.msra.mxu0 %v2061
  %2303 = vmatprep.subr.bf16.mxu0 %v2058
  %2304 = vmatpush1.bf16.msra.mxu0 %v2057
  %2305 = vmatprep.subr.bf16.mxu0 %v2054
  %2306 = vmatpush1.bf16.msra.mxu0 %v2053
  %2307 = vmatprep.subr.bf16.mxu0 %v2050
  %2308 = vmatpush1.bf16.msra.mxu0 %v2049
  %2309 = vmatprep.subr.bf16.mxu0 %v2046
  %2310 = vmatpush1.bf16.msra.mxu0 %v2045
  %2311 = vmatprep.subr.bf16.mxu0 %v2042
  %2312 = vmatpush1.bf16.msra.mxu0 %v2041
  %2313 = vmatprep.subr.bf16.mxu0 %v2102
  %2314 = vmatpush2.bf16.msra.mxu0 %v2101
  %2315 = vmatprep.subr.bf16.mxu0 %v2098
  %2316 = vmatpush2.bf16.msra.mxu0 %v2097
  %2317 = vmatprep.subr.bf16.mxu0 %v2094
  %2318 = vmatpush2.bf16.msra.mxu0 %v2093
  %2319 = vmatprep.subr.bf16.mxu0 %v2090
  %2320 = vmatpush2.bf16.msra.mxu0 %v2089
  %2321 = vmatprep.subr.bf16.mxu0 %v2086
  %2322 = vmatpush2.bf16.msra.mxu0 %v2085
  %2323 = vmatprep.subr.bf16.mxu0 %v2082
  %2324 = vmatpush2.bf16.msra.mxu0 %v2081
  %2325 = vmatprep.subr.bf16.mxu0 %v2078
  %2326 = vmatpush2.bf16.msra.mxu0 %v2077
  %2327 = vmatprep.subr.bf16.mxu0 %v2074
  %2328 = vmatpush2.bf16.msra.mxu0 %v2073
  %2329 = vmatprep.mubr.bf16.mxu0 %v1504
  %2330 = vmatmul.mubr.bf16.gmra.mxu0 %v1503
  %v2331 = vpop.f32.mrf.mxu0
  %v2332 = vadd.f32 %v1640, %v2331
  %v2333 = vpop.f32.mrf.mxu0
  %v2334 = vadd.f32 %v1644, %v2333
  %v2335 = vpop.f32.mrf.mxu0
  %v2336 = vadd.f32 %v1640, %v2335
  %v2337 = vpop.f32.mrf.mxu0
  %v2338 = vadd.f32 %v1644, %v2337
  %2339 = vdwg.mxu0
  %2340 = vmatprep.subr.bf16.mxu0 %v2134
  %2341 = vmatpush1.bf16.msra.mxu0 %v2133
  %2342 = vmatprep.subr.bf16.mxu0 %v2130
  %2343 = vmatpush1.bf16.msra.mxu0 %v2129
  %2344 = vmatprep.subr.bf16.mxu0 %v2126
  %2345 = vmatpush1.bf16.msra.mxu0 %v2125
  %2346 = vmatprep.subr.bf16.mxu0 %v2122
  %2347 = vmatpush1.bf16.msra.mxu0 %v2121
  %2348 = vmatprep.subr.bf16.mxu0 %v2118
  %2349 = vmatpush1.bf16.msra.mxu0 %v2117
  %2350 = vmatprep.subr.bf16.mxu0 %v2114
  %2351 = vmatpush1.bf16.msra.mxu0 %v2113
  %2352 = vmatprep.subr.bf16.mxu0 %v2110
  %2353 = vmatpush1.bf16.msra.mxu0 %v2109
  %2354 = vmatprep.subr.bf16.mxu0 %v2106
  %2355 = vmatpush1.bf16.msra.mxu0 %v2105
  %2356 = vmatprep.subr.bf16.mxu0 %v2166
  %2357 = vmatpush2.bf16.msra.mxu0 %v2165
  %2358 = vmatprep.subr.bf16.mxu0 %v2162
  %2359 = vmatpush2.bf16.msra.mxu0 %v2161
  %2360 = vmatprep.subr.bf16.mxu0 %v2158
  %2361 = vmatpush2.bf16.msra.mxu0 %v2157
  %2362 = vmatprep.subr.bf16.mxu0 %v2154
  %2363 = vmatpush2.bf16.msra.mxu0 %v2153
  %2364 = vmatprep.subr.bf16.mxu0 %v2150
  %2365 = vmatpush2.bf16.msra.mxu0 %v2149
  %2366 = vmatprep.subr.bf16.mxu0 %v2146
  %2367 = vmatpush2.bf16.msra.mxu0 %v2145
  %2368 = vmatprep.subr.bf16.mxu0 %v2142
  %2369 = vmatpush2.bf16.msra.mxu0 %v2141
  %2370 = vmatprep.subr.bf16.mxu0 %v2138
  %2371 = vmatpush2.bf16.msra.mxu0 %v2137
  %2372 = vmatprep.mubr.bf16.mxu0 %v1506
  %2373 = vmatmul.mubr.bf16.gmra.mxu0 %v1505
  %v2374 = vpop.f32.mrf.mxu0
  %v2375 = vadd.f32 %v2332, %v2374
  %v2376 = vpop.f32.mrf.mxu0
  %v2377 = vadd.f32 %v2334, %v2376
  %v2378 = vpop.f32.mrf.mxu0
  %v2379 = vadd.f32 %v2336, %v2378
  %v2380 = vpop.f32.mrf.mxu0
  %v2381 = vadd.f32 %v2338, %v2380
  %2382 = vdwg.mxu0
  %2383 = vmatprep.subr.bf16.mxu0 %v2072
  %2384 = vmatpush1.bf16.msra.mxu0 %v2071
  %2385 = vmatprep.subr.bf16.mxu0 %v2068
  %2386 = vmatpush1.bf16.msra.mxu0 %v2067
  %2387 = vmatprep.subr.bf16.mxu0 %v2064
  %2388 = vmatpush1.bf16.msra.mxu0 %v2063
  %2389 = vmatprep.subr.bf16.mxu0 %v2060
  %2390 = vmatpush1.bf16.msra.mxu0 %v2059
  %2391 = vmatprep.subr.bf16.mxu0 %v2056
  %2392 = vmatpush1.bf16.msra.mxu0 %v2055
  %2393 = vmatprep.subr.bf16.mxu0 %v2052
  %2394 = vmatpush1.bf16.msra.mxu0 %v2051
  %2395 = vmatprep.subr.bf16.mxu0 %v2048
  %2396 = vmatpush1.bf16.msra.mxu0 %v2047
  %2397 = vmatprep.subr.bf16.mxu0 %v2044
  %2398 = vmatpush1.bf16.msra.mxu0 %v2043
  %2399 = vmatprep.subr.bf16.mxu0 %v2104
  %2400 = vmatpush2.bf16.msra.mxu0 %v2103
  %2401 = vmatprep.subr.bf16.mxu0 %v2100
  %2402 = vmatpush2.bf16.msra.mxu0 %v2099
  %2403 = vmatprep.subr.bf16.mxu0 %v2096
  %2404 = vmatpush2.bf16.msra.mxu0 %v2095
  %2405 = vmatprep.subr.bf16.mxu0 %v2092
  %2406 = vmatpush2.bf16.msra.mxu0 %v2091
  %2407 = vmatprep.subr.bf16.mxu0 %v2088
  %2408 = vmatpush2.bf16.msra.mxu0 %v2087
  %2409 = vmatprep.subr.bf16.mxu0 %v2084
  %2410 = vmatpush2.bf16.msra.mxu0 %v2083
  %2411 = vmatprep.subr.bf16.mxu0 %v2080
  %2412 = vmatpush2.bf16.msra.mxu0 %v2079
  %2413 = vmatprep.subr.bf16.mxu0 %v2076
  %2414 = vmatpush2.bf16.msra.mxu0 %v2075
  %2415 = vmatprep.mubr.bf16.mxu0 %v1504
  %2416 = vmatmul.mubr.bf16.gmra.mxu0 %v1503
  %v2417 = vpop.f32.mrf.mxu0
  %v2418 = vadd.f32 %v1648, %v2417
  %v2419 = vpop.f32.mrf.mxu0
  %v2420 = vadd.f32 %v1652, %v2419
  %v2421 = vpop.f32.mrf.mxu0
  %v2422 = vadd.f32 %v1648, %v2421
  %v2423 = vpop.f32.mrf.mxu0
  %v2424 = vadd.f32 %v1652, %v2423
  %2425 = vdwg.mxu0
  %2426 = vmatprep.subr.bf16.mxu0 %v2136
  %2427 = vmatpush1.bf16.msra.mxu0 %v2135
  %2428 = vmatprep.subr.bf16.mxu0 %v2132
  %2429 = vmatpush1.bf16.msra.mxu0 %v2131
  %2430 = vmatprep.subr.bf16.mxu0 %v2128
  %2431 = vmatpush1.bf16.msra.mxu0 %v2127
  %2432 = vmatprep.subr.bf16.mxu0 %v2124
  %2433 = vmatpush1.bf16.msra.mxu0 %v2123
  %2434 = vmatprep.subr.bf16.mxu0 %v2120
  %2435 = vmatpush1.bf16.msra.mxu0 %v2119
  %2436 = vmatprep.subr.bf16.mxu0 %v2116
  %2437 = vmatpush1.bf16.msra.mxu0 %v2115
  %2438 = vmatprep.subr.bf16.mxu0 %v2112
  %2439 = vmatpush1.bf16.msra.mxu0 %v2111
  %2440 = vmatprep.subr.bf16.mxu0 %v2108
  %2441 = vmatpush1.bf16.msra.mxu0 %v2107
  %2442 = vmatprep.subr.bf16.mxu0 %v2168
  %2443 = vmatpush2.bf16.msra.mxu0 %v2167
  %2444 = vmatprep.subr.bf16.mxu0 %v2164
  %2445 = vmatpush2.bf16.msra.mxu0 %v2163
  %2446 = vmatprep.subr.bf16.mxu0 %v2160
  %2447 = vmatpush2.bf16.msra.mxu0 %v2159
  %2448 = vmatprep.subr.bf16.mxu0 %v2156
  %2449 = vmatpush2.bf16.msra.mxu0 %v2155
  %2450 = vmatprep.subr.bf16.mxu0 %v2152
  %2451 = vmatpush2.bf16.msra.mxu0 %v2151
  %2452 = vmatprep.subr.bf16.mxu0 %v2148
  %2453 = vmatpush2.bf16.msra.mxu0 %v2147
  %2454 = vmatprep.subr.bf16.mxu0 %v2144
  %2455 = vmatpush2.bf16.msra.mxu0 %v2143
  %2456 = vmatprep.subr.bf16.mxu0 %v2140
  %2457 = vmatpush2.bf16.msra.mxu0 %v2139
  %2458 = vmatprep.mubr.bf16.mxu0 %v1506
  %2459 = vmatmul.mubr.bf16.gmra.mxu0 %v1505
  %v2460 = vpop.f32.mrf.mxu0
  %v2461 = vadd.f32 %v2418, %v2460
  %v2462 = vpop.f32.mrf.mxu0
  %v2463 = vadd.f32 %v2420, %v2462
  %v2464 = vpop.f32.mrf.mxu0
  %v2465 = vadd.f32 %v2422, %v2464
  %v2466 = vpop.f32.mrf.mxu0
  %v2467 = vadd.f32 %v2424, %v2466
  %2468 = vdwg.mxu0
  %v2469 = vmax.f32 %v2375, 0.0
  %v2470 = vmax.f32 %v2377, 0.0
  %v2471 = vmax.f32 %v2461, 0.0
  %v2472 = vmax.f32 %v2463, 0.0
  %v2473 = vmax.f32 %v2379, 0.0
  %v2474 = vmax.f32 %v2381, 0.0
  %v2475 = vmax.f32 %v2465, 0.0
  %v2476 = vmax.f32 %v2467, 0.0
  %v2477 = vpack.c.bf16 %v2473, %v2469
  %v2478 = vpack.c.bf16 %v2474, %v2470
  %v2479 = vpack.c.bf16 %v2475, %v2471
  %v2480 = vpack.c.bf16 %v2476, %v2472
  %v2481 = vld [vmem:[%s5] sm:$0xf]
  %v2482 = vld [vmem:[%s5 + $0x4] sm:$0xf]
  %v2483 = vld [vmem:[%s5 + $0x8] sm:$0xf]
  %v2484 = vld [vmem:[%s5 + $0xc] sm:$0xf]
  %v2485 = vld [vmem:[%s5 + $0x10] sm:$0xf]
  %v2486 = vld [vmem:[%s5 + $0x14] sm:$0xf]
  %v2487 = vld [vmem:[%s5 + $0x18] sm:$0xf]
  %v2488 = vld [vmem:[%s5 + $0x1c] sm:$0xf]
  %v2489 = vld [vmem:[%s5 + $0x20] sm:$0xf]
  %v2490 = vld [vmem:[%s5 + $0x24] sm:$0xf]
  %v2491 = vld [vmem:[%s5 + $0x28] sm:$0xf]
  %v2492 = vld [vmem:[%s5 + $0x2c] sm:$0xf]
  %v2493 = vld [vmem:[%s5 + $0x30] sm:$0xf]
  %v2494 = vld [vmem:[%s5 + $0x34] sm:$0xf]
  %v2495 = vld [vmem:[%s5 + $0x38] sm:$0xf]
  %v2496 = vld [vmem:[%s5 + $0x3c] sm:$0xf]
  %v2497 = vld [vmem:[%s5 + $0x40] sm:$0xf]
  %v2498 = vld [vmem:[%s5 + $0x44] sm:$0xf]
  %v2499 = vld [vmem:[%s5 + $0x48] sm:$0xf]
  %v2500 = vld [vmem:[%s5 + $0x4c] sm:$0xf]
  %v2501 = vld [vmem:[%s5 + $0x50] sm:$0xf]
  %v2502 = vld [vmem:[%s5 + $0x54] sm:$0xf]
  %v2503 = vld [vmem:[%s5 + $0x58] sm:$0xf]
  %v2504 = vld [vmem:[%s5 + $0x5c] sm:$0xf]
  %v2505 = vld [vmem:[%s5 + $0x60] sm:$0xf]
  %v2506 = vld [vmem:[%s5 + $0x64] sm:$0xf]
  %v2507 = vld [vmem:[%s5 + $0x68] sm:$0xf]
  %v2508 = vld [vmem:[%s5 + $0x6c] sm:$0xf]
  %v2509 = vld [vmem:[%s5 + $0x70] sm:$0xf]
  %v2510 = vld [vmem:[%s5 + $0x74] sm:$0xf]
  %v2511 = vld [vmem:[%s5 + $0x78] sm:$0xf]
  %v2512 = vld [vmem:[%s5 + $0x7c] sm:$0xf]
  %v2513 = vld [vmem:[%s5 + $0x80] sm:$0xf]
  %v2514 = vld [vmem:[%s5 + $0x84] sm:$0xf]
  %v2515 = vld [vmem:[%s5 + $0x88] sm:$0xf]
  %v2516 = vld [vmem:[%s5 + $0x8c] sm:$0xf]
  %v2517 = vld [vmem:[%s5 + $0x90] sm:$0xf]
  %v2518 = vld [vmem:[%s5 + $0x94] sm:$0xf]
  %v2519 = vld [vmem:[%s5 + $0x98] sm:$0xf]
  %v2520 = vld [vmem:[%s5 + $0x9c] sm:$0xf]
  %v2521 = vld [vmem:[%s5 + $0xa0] sm:$0xf]
  %v2522 = vld [vmem:[%s5 + $0xa4] sm:$0xf]
  %v2523 = vld [vmem:[%s5 + $0xa8] sm:$0xf]
  %v2524 = vld [vmem:[%s5 + $0xac] sm:$0xf]
  %v2525 = vld [vmem:[%s5 + $0xb0] sm:$0xf]
  %v2526 = vld [vmem:[%s5 + $0xb4] sm:$0xf]
  %v2527 = vld [vmem:[%s5 + $0xb8] sm:$0xf]
  %v2528 = vld [vmem:[%s5 + $0xbc] sm:$0xf]
  %v2529 = vld [vmem:[%s5 + $0xc0] sm:$0xf]
  %v2530 = vld [vmem:[%s5 + $0xc4] sm:$0xf]
  %v2531 = vld [vmem:[%s5 + $0xc8] sm:$0xf]
  %v2532 = vld [vmem:[%s5 + $0xcc] sm:$0xf]
  %v2533 = vld [vmem:[%s5 + $0xd0] sm:$0xf]
  %v2534 = vld [vmem:[%s5 + $0xd4] sm:$0xf]
  %v2535 = vld [vmem:[%s5 + $0xd8] sm:$0xf]
  %v2536 = vld [vmem:[%s5 + $0xdc] sm:$0xf]
  %v2537 = vld [vmem:[%s5 + $0xe0] sm:$0xf]
  %v2538 = vld [vmem:[%s5 + $0xe4] sm:$0xf]
  %v2539 = vld [vmem:[%s5 + $0xe8] sm:$0xf]
  %v2540 = vld [vmem:[%s5 + $0xec] sm:$0xf]
  %v2541 = vld [vmem:[%s5 + $0xf0] sm:$0xf]
  %v2542 = vld [vmem:[%s5 + $0xf4] sm:$0xf]
  %v2543 = vld [vmem:[%s5 + $0xf8] sm:$0xf]
  %v2544 = vld [vmem:[%s5 + $0xfc] sm:$0xf]
  %v2545 = vld [vmem:[%s6] sm:$0x1]
  %v2547 = vlaneseq
  %v2548 = vshrl.u32 %v2547, 7
  %v2549 = vsub.s32 0, %v2548
  %v2550 = vrot.slane %v2545, %v2549
  %v2616 = vunpack.c.l.b16 %v2481
  %v2617 = vunpack.c.l.b16 %v2482
  %v2618 = vunpack.c.l.b16 %v2483
  %v2619 = vunpack.c.l.b16 %v2484
  %v2620 = vunpack.c.l.b16 %v2485
  %v2621 = vunpack.c.l.b16 %v2486
  %v2622 = vunpack.c.l.b16 %v2487
  %v2623 = vunpack.c.l.b16 %v2488
  %v2624 = vunpack.c.l.b16 %v2489
  %v2625 = vunpack.c.l.b16 %v2490
  %v2626 = vunpack.c.l.b16 %v2491
  %v2627 = vunpack.c.l.b16 %v2492
  %v2628 = vunpack.c.l.b16 %v2493
  %v2629 = vunpack.c.l.b16 %v2494
  %v2630 = vunpack.c.l.b16 %v2495
  %v2631 = vunpack.c.l.b16 %v2496
  %v2632 = vunpack.c.l.b16 %v2497
  %v2633 = vunpack.c.l.b16 %v2498
  %v2634 = vunpack.c.l.b16 %v2499
  %v2635 = vunpack.c.l.b16 %v2500
  %v2636 = vunpack.c.l.b16 %v2501
  %v2637 = vunpack.c.l.b16 %v2502
  %v2638 = vunpack.c.l.b16 %v2503
  %v2639 = vunpack.c.l.b16 %v2504
  %v2640 = vunpack.c.l.b16 %v2505
  %v2641 = vunpack.c.l.b16 %v2506
  %v2642 = vunpack.c.l.b16 %v2507
  %v2643 = vunpack.c.l.b16 %v2508
  %v2644 = vunpack.c.l.b16 %v2509
  %v2645 = vunpack.c.l.b16 %v2510
  %v2646 = vunpack.c.l.b16 %v2511
  %v2647 = vunpack.c.l.b16 %v2512
  %v2648 = vunpack.c.l.b16 %v2513
  %v2649 = vunpack.c.l.b16 %v2514
  %v2650 = vunpack.c.l.b16 %v2515
  %v2651 = vunpack.c.l.b16 %v2516
  %v2652 = vunpack.c.l.b16 %v2517
  %v2653 = vunpack.c.l.b16 %v2518
  %v2654 = vunpack.c.l.b16 %v2519
  %v2655 = vunpack.c.l.b16 %v2520
  %v2656 = vunpack.c.l.b16 %v2521
  %v2657 = vunpack.c.l.b16 %v2522
  %v2658 = vunpack.c.l.b16 %v2523
  %v2659 = vunpack.c.l.b16 %v2524
  %v2660 = vunpack.c.l.b16 %v2525
  %v2661 = vunpack.c.l.b16 %v2526
  %v2662 = vunpack.c.l.b16 %v2527
  %v2663 = vunpack.c.l.b16 %v2528
  %v2664 = vunpack.c.l.b16 %v2529
  %v2665 = vunpack.c.l.b16 %v2530
  %v2666 = vunpack.c.l.b16 %v2531
  %v2667 = vunpack.c.l.b16 %v2532
  %v2668 = vunpack.c.l.b16 %v2533
  %v2669 = vunpack.c.l.b16 %v2534
  %v2670 = vunpack.c.l.b16 %v2535
  %v2671 = vunpack.c.l.b16 %v2536
  %v2672 = vunpack.c.l.b16 %v2537
  %v2673 = vunpack.c.l.b16 %v2538
  %v2674 = vunpack.c.l.b16 %v2539
  %v2675 = vunpack.c.l.b16 %v2540
  %v2676 = vunpack.c.l.b16 %v2541
  %v2677 = vunpack.c.l.b16 %v2542
  %v2678 = vunpack.c.l.b16 %v2543
  %v2679 = vunpack.c.l.b16 %v2544
  %v2680 = vpack.c.b16 %v2617, %v2616
  %v2681 = vpack.c.b16 %v2619, %v2618
  %v2682 = vpack.c.b16 %v2621, %v2620
  %v2683 = vpack.c.b16 %v2623, %v2622
  %v2684 = vpack.c.b16 %v2625, %v2624
  %v2685 = vpack.c.b16 %v2627, %v2626
  %v2686 = vpack.c.b16 %v2629, %v2628
  %v2687 = vpack.c.b16 %v2631, %v2630
  %v2688 = vpack.c.b16 %v2633, %v2632
  %v2689 = vpack.c.b16 %v2635, %v2634
  %v2690 = vpack.c.b16 %v2637, %v2636
  %v2691 = vpack.c.b16 %v2639, %v2638
  %v2692 = vpack.c.b16 %v2641, %v2640
  %v2693 = vpack.c.b16 %v2643, %v2642
  %v2694 = vpack.c.b16 %v2645, %v2644
  %v2695 = vpack.c.b16 %v2647, %v2646
  %v2696 = vpack.c.b16 %v2649, %v2648
  %v2697 = vpack.c.b16 %v2651, %v2650
  %v2698 = vpack.c.b16 %v2653, %v2652
  %v2699 = vpack.c.b16 %v2655, %v2654
  %v2700 = vpack.c.b16 %v2657, %v2656
  %v2701 = vpack.c.b16 %v2659, %v2658
  %v2702 = vpack.c.b16 %v2661, %v2660
  %v2703 = vpack.c.b16 %v2663, %v2662
  %v2704 = vpack.c.b16 %v2665, %v2664
  %v2705 = vpack.c.b16 %v2667, %v2666
  %v2706 = vpack.c.b16 %v2669, %v2668
  %v2707 = vpack.c.b16 %v2671, %v2670
  %v2708 = vpack.c.b16 %v2673, %v2672
  %v2709 = vpack.c.b16 %v2675, %v2674
  %v2710 = vpack.c.b16 %v2677, %v2676
  %v2711 = vpack.c.b16 %v2679, %v2678
  %2744 = vmatprep.subr.bf16.mxu0 0
  %2745 = vmatpush1.bf16.msra.mxu0 %v2687
  %2746 = vmatprep.subr.bf16.mxu0 0
  %2747 = vmatpush1.bf16.msra.mxu0 %v2686
  %2748 = vmatprep.subr.bf16.mxu0 0
  %2749 = vmatpush1.bf16.msra.mxu0 %v2685
  %2750 = vmatprep.subr.bf16.mxu0 0
  %2751 = vmatpush1.bf16.msra.mxu0 %v2684
  %2752 = vmatprep.subr.bf16.mxu0 0
  %2753 = vmatpush1.bf16.msra.mxu0 %v2683
  %2754 = vmatprep.subr.bf16.mxu0 0
  %2755 = vmatpush1.bf16.msra.mxu0 %v2682
  %2756 = vmatprep.subr.bf16.mxu0 0
  %2757 = vmatpush1.bf16.msra.mxu0 %v2681
  %2758 = vmatprep.subr.bf16.mxu0 0
  %2759 = vmatpush1.bf16.msra.mxu0 %v2680
  %2760 = vmatprep.subr.bf16.mxu0 0
  %2761 = vmatpush2.bf16.msra.mxu0 %v2695
  %2762 = vmatprep.subr.bf16.mxu0 0
  %2763 = vmatpush2.bf16.msra.mxu0 %v2694
  %2764 = vmatprep.subr.bf16.mxu0 0
  %2765 = vmatpush2.bf16.msra.mxu0 %v2693
  %2766 = vmatprep.subr.bf16.mxu0 0
  %2767 = vmatpush2.bf16.msra.mxu0 %v2692
  %2768 = vmatprep.subr.bf16.mxu0 0
  %2769 = vmatpush2.bf16.msra.mxu0 %v2691
  %2770 = vmatprep.subr.bf16.mxu0 0
  %2771 = vmatpush2.bf16.msra.mxu0 %v2690
  %2772 = vmatprep.subr.bf16.mxu0 0
  %2773 = vmatpush2.bf16.msra.mxu0 %v2689
  %2774 = vmatprep.subr.bf16.mxu0 0
  %2775 = vmatpush2.bf16.msra.mxu0 %v2688
  %2776 = vmatprep.mubr.bf16.mxu0 %v2478
  %2777 = vmatmul.mubr.bf16.gmra.mxu0 %v2477
  %v2778 = vpop.f32.mrf.mxu0
  %v2779 = vadd.f32 %v2550, %v2778
  %v2780 = vpop.f32.mrf.mxu0
  %v2781 = vpop.f32.mrf.mxu0
  %v2782 = vadd.f32 %v2550, %v2781
  %v2783 = vpop.f32.mrf.mxu0
  %2784 = vdwg.mxu0
  %2785 = vmatprep.subr.bf16.mxu0 0
  %2786 = vmatpush1.bf16.msra.mxu0 %v2703
  %2787 = vmatprep.subr.bf16.mxu0 0
  %2788 = vmatpush1.bf16.msra.mxu0 %v2702
  %2789 = vmatprep.subr.bf16.mxu0 0
  %2790 = vmatpush1.bf16.msra.mxu0 %v2701
  %2791 = vmatprep.subr.bf16.mxu0 0
  %2792 = vmatpush1.bf16.msra.mxu0 %v2700
  %2793 = vmatprep.subr.bf16.mxu0 0
  %2794 = vmatpush1.bf16.msra.mxu0 %v2699
  %2795 = vmatprep.subr.bf16.mxu0 0
  %2796 = vmatpush1.bf16.msra.mxu0 %v2698
  %2797 = vmatprep.subr.bf16.mxu0 0
  %2798 = vmatpush1.bf16.msra.mxu0 %v2697
  %2799 = vmatprep.subr.bf16.mxu0 0
  %2800 = vmatpush1.bf16.msra.mxu0 %v2696
  %2801 = vmatprep.subr.bf16.mxu0 0
  %2802 = vmatpush2.bf16.msra.mxu0 %v2711
  %2803 = vmatprep.subr.bf16.mxu0 0
  %2804 = vmatpush2.bf16.msra.mxu0 %v2710
  %2805 = vmatprep.subr.bf16.mxu0 0
  %2806 = vmatpush2.bf16.msra.mxu0 %v2709
  %2807 = vmatprep.subr.bf16.mxu0 0
  %2808 = vmatpush2.bf16.msra.mxu0 %v2708
  %2809 = vmatprep.subr.bf16.mxu0 0
  %2810 = vmatpush2.bf16.msra.mxu0 %v2707
  %2811 = vmatprep.subr.bf16.mxu0 0
  %2812 = vmatpush2.bf16.msra.mxu0 %v2706
  %2813 = vmatprep.subr.bf16.mxu0 0
  %2814 = vmatpush2.bf16.msra.mxu0 %v2705
  %2815 = vmatprep.subr.bf16.mxu0 0
  %2816 = vmatpush2.bf16.msra.mxu0 %v2704
  %2817 = vmatprep.mubr.bf16.mxu0 %v2480
  %2818 = vmatmul.mubr.bf16.gmra.mxu0 %v2479
  %v2819 = vpop.f32.mrf.mxu0
  %v2820 = vadd.f32 %v2779, %v2819
  %v2821 = vpop.f32.mrf.mxu0
  %v2822 = vpop.f32.mrf.mxu0
  %v2823 = vadd.f32 %v2782, %v2822
  %v2824 = vpop.f32.mrf.mxu0
  %2825 = vdwg.mxu0
  %2826 = vst [vmem:[%s7] sm:$0xff] %v2820
  %2827 = vst [vmem:[%s7 + $0x8] sm:$0xff] %v2823
  // Predicated region
  $region30: #{mzkbert_forward.1} parent=0 // pred_check
    _
  $region31: #{mzkbert_forward.1} parent=0 // pred_check_branch
    %2829 = sbr.rel (0) target = $region33
  $region32: #{mzkbert_forward.1} parent=0 // pred_region
    _
  $region33: #{mzkbert_forward.1} parent=0 // pred_fallthru
    _
  // Predicated region
  $region34: #{mzkbert_forward.1} parent=0 // pred_check
    _
  $region35: #{mzkbert_forward.1} parent=0 // pred_check_branch
    %2831 = sbr.rel (0) target = $region37
  $region36: #{mzkbert_forward.1} parent=0 // pred_region
    _
  $region37: #{mzkbert_forward.1} parent=0 // pred_fallthru
    _

</llo_original>
